<compile_context>
chip_gen: v7x
topology: tpu7x:2x2x1
jax: 0.10.0
libtpu: 0.0.40
codegen_flags: <defaults>
</compile_context>

<pallas_src>
import functools
import math

import jax
import jax.numpy as jnp
from jax.experimental import pallas as pl
from jax.experimental.pallas import tpu as pltpu

# Leave headroom under v7x's 64 MiB physical VMEM while raising the default scoped limit.
_VMEM_LIMIT_BYTES = 48 * 1024 * 1024
_GELU_C = math.sqrt(2.0 / math.pi)


def _mosaic_params(*dims):
    return pltpu.CompilerParams(dimension_semantics=dims,
                                vmem_limit_bytes=_VMEM_LIMIT_BYTES)


def _row_tile(n, cap=512):
    """Largest row tile <= cap that divides n; tile is a multiple of 8 or equals n (full dim)."""
    if n <= cap:
        return n
    for t in range(cap, 7, -1):
        if n % t == 0 and t % 8 == 0:
            return t
    return n


def _layernorm(y, gamma, beta):
    mean = jnp.mean(y, axis=-1, keepdims=True)
    var = jnp.mean((y - mean) * (y - mean), axis=-1, keepdims=True)
    return (y - mean) * jax.lax.rsqrt(var + 1e-5) * gamma + beta


def _attention_heads(q, k, v, attn_ref, ctx_sc, *, n_heads, d_k, d_v, compute_dtype):
    """Per-head softmax(QK^T)V. q is pre-scaled.  Writes attn probs + lane-dense context."""
    for h in range(n_heads):
        qh = q[:, h * d_k:(h + 1) * d_k].astype(compute_dtype)          # [Sq, d_k]
        kh = k[:, h * d_k:(h + 1) * d_k].astype(compute_dtype)          # [Skv, d_k]
        vh = v[:, h * d_v:(h + 1) * d_v].astype(compute_dtype)          # [Skv, d_v]

        s = jnp.dot(qh, kh.T, preferred_element_type=jnp.float32)       # [Sq, Skv]
        m = jnp.max(s, axis=-1, keepdims=True)
        e = jnp.exp(s - m)
        # Reciprocal on the EUP slot (frees VPU slots in the softmax region).
        p = e * pl.reciprocal(jnp.sum(e, axis=-1, keepdims=True), approx=True)

        attn_ref[0, h] = p                                               # [Sq, Skv]
        ctx_sc[:, h * d_v:(h + 1) * d_v] = jnp.dot(
            p.astype(compute_dtype), vh, preferred_element_type=jnp.float32)


# ----------------------------------------------------------------------------
# Kernel: fully-fused SELF multi-head attention block, one batch element per grid step.
#   qkv = x @ [Wq|Wk|Wv] + b ; per-head attention ; out = LayerNorm(ctx @ Wo + bo + x)
# ----------------------------------------------------------------------------
def _mha_self_kernel(x_ref, wqkv_ref, bqkv_ref, wo_ref, bo_ref, g_ref, beta_ref,
                     out_ref, attn_ref, ctx_sc, *, n_heads, d_k, d_v, scale, compute_dtype):
    x = x_ref[0]                                                        # [Sq, d_model] f32
    qkv = (jnp.dot(x.astype(compute_dtype), wqkv_ref[...],
                   preferred_element_type=jnp.float32) + bqkv_ref[...])
    dq = n_heads * d_k
    # Fold 1/sqrt(d_k) into q (Sq*H*d_k multiplies instead of Sq*Sk per head).
    q = qkv[:, :dq] * scale
    k = qkv[:, dq:2 * dq]
    v = qkv[:, 2 * dq:]
    _attention_heads(q, k, v, attn_ref, ctx_sc,
                     n_heads=n_heads, d_k=d_k, d_v=d_v, compute_dtype=compute_dtype)
    y = (jnp.dot(ctx_sc[...].astype(compute_dtype), wo_ref[...],
                 preferred_element_type=jnp.float32) + bo_ref[...]) + x
    out_ref[0] = _layernorm(y, g_ref[...], beta_ref[...])


def mha_self_fused(x3, wqkv, bqkv, wo, bo, gamma, beta, *, n_heads, d_k, d_v, compute_dtype):
    """x3: [B, Sq, d_model] -> (out [B, Sq, d_model], attn [B, H, Sq, Sq])."""
    B, Sq, d_model = x3.shape
    Dqkv = wqkv.shape[1]
    scale = 1.0 / math.sqrt(d_k)
    kernel = functools.partial(_mha_self_kernel, n_heads=n_heads, d_k=d_k, d_v=d_v,
                               scale=scale, compute_dtype=compute_dtype)
    return pl.pallas_call(
        kernel,
        out_shape=(jax.ShapeDtypeStruct((B, Sq, d_model), jnp.float32),
                   jax.ShapeDtypeStruct((B, n_heads, Sq, Sq), jnp.float32)),
        grid=(B,),
        in_specs=[
            pl.BlockSpec((1, Sq, d_model), lambda b: (b, 0, 0)),
            pl.BlockSpec((d_model, Dqkv), lambda b: (0, 0)),
            pl.BlockSpec((1, Dqkv), lambda b: (0, 0)),
            pl.BlockSpec((n_heads * d_v, d_model), lambda b: (0, 0)),
            pl.BlockSpec((1, d_model), lambda b: (0, 0)),
            pl.BlockSpec((1, d_model), lambda b: (0, 0)),
            pl.BlockSpec((1, d_model), lambda b: (0, 0)),
        ],
        out_specs=(pl.BlockSpec((1, Sq, d_model), lambda b: (b, 0, 0)),
                   pl.BlockSpec((1, n_heads, Sq, Sq), lambda b: (b, 0, 0, 0))),
        scratch_shapes=[pltpu.VMEM((Sq, n_heads * d_v), jnp.float32)],
        compiler_params=_mosaic_params("parallel"),
    )(x3, wqkv.astype(compute_dtype), bqkv, wo.astype(compute_dtype), bo, gamma, beta)


# ----------------------------------------------------------------------------
# Kernel: fully-fused CROSS multi-head attention block, one batch element per grid step.
#   q = xq @ Wq + bq ; kv = xkv @ [Wk|Wv] + b ; per-head attention ;
#   out = LayerNorm(ctx @ Wo + bo + xq)
# ----------------------------------------------------------------------------
def _mha_cross_kernel(xq_ref, xkv_ref, wq_ref, bq_ref, wkv_ref, bkv_ref,
                      wo_ref, bo_ref, g_ref, beta_ref,
                      out_ref, attn_ref, ctx_sc, *, n_heads, d_k, d_v, scale, compute_dtype):
    xq = xq_ref[0]                                                      # [Sq, d_model]
    xkv = xkv_ref[0]                                                    # [Skv, d_model]
    q = (jnp.dot(xq.astype(compute_dtype), wq_ref[...],
                 preferred_element_type=jnp.float32) + bq_ref[...]) * scale
    kv = (jnp.dot(xkv.astype(compute_dtype), wkv_ref[...],
                  preferred_element_type=jnp.float32) + bkv_ref[...])
    dk_tot = n_heads * d_k
    k = kv[:, :dk_tot]
    v = kv[:, dk_tot:]
    _attention_heads(q, k, v, attn_ref, ctx_sc,
                     n_heads=n_heads, d_k=d_k, d_v=d_v, compute_dtype=compute_dtype)
    y = (jnp.dot(ctx_sc[...].astype(compute_dtype), wo_ref[...],
                 preferred_element_type=jnp.float32) + bo_ref[...]) + xq
    out_ref[0] = _layernorm(y, g_ref[...], beta_ref[...])


def mha_cross_fused(xq3, xkv3, wq, bq, wkv, bkv, wo, bo, gamma, beta, *,
                    n_heads, d_k, d_v, compute_dtype):
    """xq3: [B, Sq, d_model], xkv3: [B, Skv, d_model] -> (out [B,Sq,d_model], attn [B,H,Sq,Skv])."""
    B, Sq, d_model = xq3.shape
    Skv = xkv3.shape[1]
    Dq, Dkv = wq.shape[1], wkv.shape[1]
    scale = 1.0 / math.sqrt(d_k)
    kernel = functools.partial(_mha_cross_kernel, n_heads=n_heads, d_k=d_k, d_v=d_v,
                               scale=scale, compute_dtype=compute_dtype)
    return pl.pallas_call(
        kernel,
        out_shape=(jax.ShapeDtypeStruct((B, Sq, d_model), jnp.float32),
                   jax.ShapeDtypeStruct((B, n_heads, Sq, Skv), jnp.float32)),
        grid=(B,),
        in_specs=[
            pl.BlockSpec((1, Sq, d_model), lambda b: (b, 0, 0)),
            pl.BlockSpec((1, Skv, d_model), lambda b: (b, 0, 0)),
            pl.BlockSpec((d_model, Dq), lambda b: (0, 0)),
            pl.BlockSpec((1, Dq), lambda b: (0, 0)),
            pl.BlockSpec((d_model, Dkv), lambda b: (0, 0)),
            pl.BlockSpec((1, Dkv), lambda b: (0, 0)),
            pl.BlockSpec((n_heads * d_v, d_model), lambda b: (0, 0)),
            pl.BlockSpec((1, d_model), lambda b: (0, 0)),
            pl.BlockSpec((1, d_model), lambda b: (0, 0)),
            pl.BlockSpec((1, d_model), lambda b: (0, 0)),
        ],
        out_specs=(pl.BlockSpec((1, Sq, d_model), lambda b: (b, 0, 0)),
                   pl.BlockSpec((1, n_heads, Sq, Skv), lambda b: (b, 0, 0, 0))),
        scratch_shapes=[pltpu.VMEM((Sq, n_heads * d_v), jnp.float32)],
        compiler_params=_mosaic_params("parallel"),
    )(xq3, xkv3, wq.astype(compute_dtype), bq, wkv.astype(compute_dtype), bkv,
      wo.astype(compute_dtype), bo, gamma, beta)


# ----------------------------------------------------------------------------
# Kernel: fused position-wise FFN + residual + LayerNorm (row-tiled over B*S)
#   out = LayerNorm( GELU_tanh(x @ W1 + b1) @ W2 + b2 + x )
# ----------------------------------------------------------------------------
def _ffn_res_ln_kernel(x_ref, w1_ref, b1_ref, w2_ref, b2_ref, g_ref, beta_ref, o_ref, *,
                       compute_dtype):
    x = x_ref[...]                                                      # f32 [tm, d_model]
    h = (jnp.dot(x.astype(compute_dtype), w1_ref[...],
                 preferred_element_type=jnp.float32) + b1_ref[...])
    # tanh-approx GELU exactly as in the PyTorch module (kept in f32 on VPU/EUP).
    h = 0.5 * h * (1.0 + jnp.tanh(_GELU_C * (h + 0.044715 * h * h * h)))
    y = (jnp.dot(h.astype(compute_dtype), w2_ref[...],
                 preferred_element_type=jnp.float32) + b2_ref[...]) + x
    o_ref[...] = _layernorm(y, g_ref[...], beta_ref[...])


def ffn_residual_layernorm(x2d, w1, b1, w2, b2, gamma, beta, compute_dtype):
    N, d_model = x2d.shape
    d_ff = w1.shape[1]
    tm = _row_tile(N, cap=256)
    kernel = functools.partial(_ffn_res_ln_kernel, compute_dtype=compute_dtype)
    return pl.pallas_call(
        kernel,
        out_shape=jax.ShapeDtypeStruct((N, d_model), jnp.float32),
        grid=(N // tm,),
        in_specs=[
            pl.BlockSpec((tm, d_model), lambda i: (i, 0)),
            pl.BlockSpec((d_model, d_ff), lambda i: (0, 0)),
            pl.BlockSpec((1, d_ff), lambda i: (0, 0)),
            pl.BlockSpec((d_ff, d_model), lambda i: (0, 0)),
            pl.BlockSpec((1, d_model), lambda i: (0, 0)),
            pl.BlockSpec((1, d_model), lambda i: (0, 0)),
            pl.BlockSpec((1, d_model), lambda i: (0, 0)),
        ],
        out_specs=pl.BlockSpec((tm, d_model), lambda i: (i, 0)),
        compiler_params=_mosaic_params("parallel"),
    )(x2d, w1.astype(compute_dtype), b1, w2.astype(compute_dtype), b2, gamma, beta)


# ----------------------------------------------------------------------------
# Module wrappers
# ----------------------------------------------------------------------------
def decoder_layer_forward(p, dec_inputs, enc_outputs, *, n_heads, d_k, d_v, compute_dtype):
    sp = p["self_attn"]
    wqkv = jnp.concatenate([sp["w_q"], sp["w_k"], sp["w_v"]], axis=1)
    bqkv = jnp.concatenate([sp["b_q"], sp["b_k"], sp["b_v"]], axis=1)
    x, self_attn = mha_self_fused(dec_inputs, wqkv, bqkv, sp["w_o"], sp["b_o"],
                                  sp["ln_g"], sp["ln_b"],
                                  n_heads=n_heads, d_k=d_k, d_v=d_v,
                                  compute_dtype=compute_dtype)

    cp = p["enc_attn"]
    wkv = jnp.concatenate([cp["w_k"], cp["w_v"]], axis=1)
    bkv = jnp.concatenate([cp["b_k"], cp["b_v"]], axis=1)
    x, enc_attn = mha_cross_fused(x, enc_outputs, cp["w_q"], cp["b_q"], wkv, bkv,
                                  cp["w_o"], cp["b_o"], cp["ln_g"], cp["ln_b"],
                                  n_heads=n_heads, d_k=d_k, d_v=d_v,
                                  compute_dtype=compute_dtype)

    B, S, d_model = x.shape
    x2d = ffn_residual_layernorm(x.reshape(B * S, d_model),
                                 p["ffn"]["w1"], p["ffn"]["b1"],
                                 p["ffn"]["w2"], p["ffn"]["b2"],
                                 p["ffn"]["ln_g"], p["ffn"]["ln_b"], compute_dtype)
    return x2d.reshape(B, S, d_model), self_attn, enc_attn


def decoder_forward(params, dec_inputs, enc_inputs, enc_outputs, *,
                    n_heads, d_k, d_v, compute_dtype=jnp.float32):
    del enc_inputs  # present in the PyTorch signature but unused (no masking in this module)
    x = dec_inputs  # PositionalEncoding: dropout(p=0) == identity
    self_attns, enc_attns = [], []
    for lp in params["layers"]:
        x, sa, ea = decoder_layer_forward(lp, x, enc_outputs, n_heads=n_heads,
                                          d_k=d_k, d_v=d_v, compute_dtype=compute_dtype)
        self_attns.append(sa)
        enc_attns.append(ea)
    self_attns = jnp.transpose(jnp.stack(self_attns, axis=0), (1, 0, 2, 3, 4))  # [B, L, H, Sq, Sq]
    enc_attns = jnp.transpose(jnp.stack(enc_attns, axis=0), (1, 0, 2, 3, 4))    # [B, L, H, Sq, Sk]
    return x, self_attns, enc_attns


# ----------------------------------------------------------------------------
# Pure-JAX reference (for correctness check)
# ----------------------------------------------------------------------------
def _mha_ref(p, Q, K, V, n_heads, d_k, d_v):
    B, Sq, d_model = Q.shape
    Skv = K.shape[1]
    q = (Q @ p["w_q"] + p["b_q"][0]).reshape(B, Sq, n_heads, d_k).transpose(0, 2, 1, 3)
    k = (K @ p["w_k"] + p["b_k"][0]).reshape(B, Skv, n_heads, d_k).transpose(0, 2, 1, 3)
    v = (V @ p["w_v"] + p["b_v"][0]).reshape(B, Skv, n_heads, d_v).transpose(0, 2, 1, 3)
    s = jnp.einsum("bhqd,bhkd->bhqk", q, k) / math.sqrt(d_k)
    attn = jax.nn.softmax(s, axis=-1)
    ctx = jnp.einsum("bhqk,bhkd->bhqd", attn, v)
    ctx = ctx.transpose(0, 2, 1, 3).reshape(B, Sq, n_heads * d_v)
    y = ctx @ p["w_o"] + p["b_o"][0] + Q
    mean = jnp.mean(y, -1, keepdims=True)
    var = jnp.mean((y - mean) ** 2, -1, keepdims=True)
    return (y - mean) / jnp.sqrt(var + 1e-5) * p["ln_g"][0] + p["ln_b"][0], attn


def _ffn_ref(p, x):
    h = x @ p["w1"] + p["b1"][0]
    h = 0.5 * h * (1.0 + jnp.tanh(_GELU_C * (h + 0.044715 * h ** 3)))
    y = h @ p["w2"] + p["b2"][0] + x
    mean = jnp.mean(y, -1, keepdims=True)
    var = jnp.mean((y - mean) ** 2, -1, keepdims=True)
    return (y - mean) / jnp.sqrt(var + 1e-5) * p["ln_g"][0] + p["ln_b"][0]


def decoder_reference(params, dec_inputs, enc_inputs, enc_outputs, *, n_heads, d_k, d_v):
    del enc_inputs
    x = dec_inputs
    sas, eas = [], []
    for lp in params["layers"]:
        x, sa = _mha_ref(lp["self_attn"], x, x, x, n_heads, d_k, d_v)
        x, ea = _mha_ref(lp["enc_attn"], x, enc_outputs, enc_outputs, n_heads, d_k, d_v)
        x = _ffn_ref(lp["ffn"], x)
        sas.append(sa)
        eas.append(ea)
    return (x,
            jnp.transpose(jnp.stack(sas, 0), (1, 0, 2, 3, 4)),
            jnp.transpose(jnp.stack(eas, 0), (1, 0, 2, 3, 4)))


# ----------------------------------------------------------------------------
# Parameter init (PyTorch nn.Linear-style uniform init; weights stored [in, out])
# ----------------------------------------------------------------------------
def _init_linear(key, fan_in, fan_out):
    kw, kb = jax.random.split(key)
    bound = 1.0 / math.sqrt(fan_in)
    w = jax.random.uniform(kw, (fan_in, fan_out), jnp.float32, -bound, bound)
    b = jax.random.uniform(kb, (1, fan_out), jnp.float32, -bound, bound)
    return w, b


def init_decoder_params(key, d_model, d_ff, d_k, d_v, n_heads, n_layers):
    def mha_params(keys):
        wq, bq = _init_linear(keys[0], d_model, n_heads * d_k)
        wk, bk = _init_linear(keys[1], d_model, n_heads * d_k)
        wv, bv = _init_linear(keys[2], d_model, n_heads * d_v)
        wo, bo = _init_linear(keys[3], n_heads * d_v, d_model)
        return {"w_q": wq, "b_q": bq, "w_k": wk, "b_k": bk, "w_v": wv, "b_v": bv,
                "w_o": wo, "b_o": bo,
                "ln_g": jnp.ones((1, d_model), jnp.float32),
                "ln_b": jnp.zeros((1, d_model), jnp.float32)}

    layers = []
    for _ in range(n_layers):
        key, sub = jax.random.split(key)
        ks = jax.random.split(sub, 10)
        w1, b1 = _init_linear(ks[8], d_model, d_ff)
        w2, b2 = _init_linear(ks[9], d_ff, d_model)
        layers.append({
            "self_attn": mha_params(ks[0:4]),
            "enc_attn": mha_params(ks[4:8]),
            "ffn": {"w1": w1, "b1": b1, "w2": w2, "b2": b2,
                    "ln_g": jnp.ones((1, d_model), jnp.float32),
                    "ln_b": jnp.zeros((1, d_model), jnp.float32)},
        })
    return {"layers": layers}


# ----------------------------------------------------------------------------
# Main
# ----------------------------------------------------------------------------
if __name__ == "__main__":
    B, S_dec, S_enc = 2, 8, 16
    d_model, d_ff, d_k, d_v, n_heads, n_layers = 32, 64, 8, 8, 4, 2

    root = jax.random.PRNGKey(0)
    k_par, k_dec, k_enc_in, k_enc_out = jax.random.split(root, 4)
    params = init_decoder_params(k_par, d_model, d_ff, d_k, d_v, n_heads, n_layers)

    dec_inputs = jax.random.normal(k_dec, (B, S_dec, d_model), jnp.float32)
    enc_inputs = jax.random.normal(k_enc_in, (B, S_enc, d_model), jnp.float32)   # unused by module
    enc_outputs = jax.random.normal(k_enc_out, (B, S_enc, d_model), jnp.float32)

    # f32-operand run: correctness check against the pure-JAX reference.
    out, sa, ea = decoder_forward(params, dec_inputs, enc_inputs, enc_outputs,
                                  n_heads=n_heads, d_k=d_k, d_v=d_v,
                                  compute_dtype=jnp.float32)
    out, sa, ea = jax.block_until_ready((out, sa, ea))

    ref_out, ref_sa, ref_ea = decoder_reference(params, dec_inputs, enc_inputs, enc_outputs,
                                                n_heads=n_heads, d_k=d_k, d_v=d_v)
    assert out.shape == (B, S_dec, d_model)
    assert sa.shape == (B, n_layers, n_heads, S_dec, S_dec)
    assert ea.shape == (B, n_layers, n_heads, S_dec, S_enc)
    # Tolerance accounts for the approx-EUP reciprocal in the softmax.
    assert jnp.allclose(out, ref_out, atol=5e-2, rtol=5e-2), "dec_outputs mismatch vs reference"
    assert jnp.allclose(sa, ref_sa, atol=5e-2, rtol=5e-2), "self-attn maps mismatch vs reference"
    assert jnp.allclose(ea, ref_ea, atol=5e-2, rtol=5e-2), "enc-attn maps mismatch vs reference"

    # bf16-operand / f32-accumulate run (recommended config for v6e/v7x) — checked loosely:
    # bf16 operand rounding widens error bars; the f32 run above carries the numeric check.
    out_bf, sa_bf, ea_bf = decoder_forward(params, dec_inputs, enc_inputs, enc_outputs,
                                           n_heads=n_heads, d_k=d_k, d_v=d_v,
                                           compute_dtype=jnp.bfloat16)
    out_bf = jax.block_until_ready(out_bf)
    assert out_bf.shape == out.shape
    assert bool(jnp.all(jnp.isfinite(out_bf)))
    assert jnp.allclose(out_bf, ref_out, atol=3e-1, rtol=3e-1)

    print("KERNEL_OK")
</pallas_src>

<mosaic_0001>
module attributes {stable_mosaic.version = 11 : i64} {
  func.func @_mha_self_kernel(%arg0: i32, %arg1: memref<1x8x32xf32, #tpu.memory_space<vmem>>, %arg2: memref<32x96xf32, #tpu.memory_space<vmem>>, %arg3: memref<1x96xf32, #tpu.memory_space<vmem>>, %arg4: memref<32x32xf32, #tpu.memory_space<vmem>>, %arg5: memref<1x32xf32, #tpu.memory_space<vmem>>, %arg6: memref<1x32xf32, #tpu.memory_space<vmem>>, %arg7: memref<1x32xf32, #tpu.memory_space<vmem>>, %arg8: memref<1x8x32xf32, #tpu.memory_space<vmem>>, %arg9: memref<1x4x8x8xf32, #tpu.memory_space<vmem>>, %arg10: memref<8x32xf32, #tpu.memory_space<vmem>>) attributes {dimension_semantics = [#tpu.dimension_semantics<parallel>], iteration_bounds = array<i64: 2>, scalar_prefetch = 0 : i64, scratch_operands = 1 : i64, tpu.core_type = #tpu.core_type<tc>, window_params = [{transform_indices = @transform_0, window_bounds = array<i64: 1, 8, 32>}, {pipeline_mode = #tpu.pipeline_mode<synchronous>, transform_indices = @transform_1, window_bounds = array<i64: 32, 96>}, {pipeline_mode = #tpu.pipeline_mode<synchronous>, transform_indices = @transform_2, window_bounds = array<i64: 1, 96>}, {pipeline_mode = #tpu.pipeline_mode<synchronous>, transform_indices = @transform_3, window_bounds = array<i64: 32, 32>}, {pipeline_mode = #tpu.pipeline_mode<synchronous>, transform_indices = @transform_4, window_bounds = array<i64: 1, 32>}, {pipeline_mode = #tpu.pipeline_mode<synchronous>, transform_indices = @transform_5, window_bounds = array<i64: 1, 32>}, {pipeline_mode = #tpu.pipeline_mode<synchronous>, transform_indices = @transform_6, window_bounds = array<i64: 1, 32>}, {transform_indices = @transform_7, window_bounds = array<i64: 1, 8, 32>}, {transform_indices = @transform_8, window_bounds = array<i64: 1, 4, 8, 8>}]} {
    %c0 = arith.constant 0 : index
    %c0_0 = arith.constant 0 : index
    %c0_1 = arith.constant 0 : index
    %0 = vector.load %arg1[%c0, %c0_0, %c0_1] : memref<1x8x32xf32, #tpu.memory_space<vmem>>, vector<1x8x32xf32>
    %1 = vector.shape_cast %0 : vector<1x8x32xf32> to vector<8x32xf32>
    %c0_2 = arith.constant 0 : index
    %c0_3 = arith.constant 0 : index
    %2 = vector.load %arg2[%c0_2, %c0_3] : memref<32x96xf32, #tpu.memory_space<vmem>>, vector<32x96xf32>
    %cst = arith.constant dense<0.000000e+00> : vector<8x96xf32>
    %3 = tpu.matmul %1, %2, %cst {dimension_numbers = #tpu.dot_dimension_numbers<[1], [0], [0], [1], [0, 0, 1, 1], [], []>} : vector<8x32xf32>, vector<32x96xf32>, vector<8x96xf32> -> vector<8x96xf32>
    %c0_4 = arith.constant 0 : index
    %c0_5 = arith.constant 0 : index
    %4 = vector.load %arg3[%c0_4, %c0_5] : memref<1x96xf32, #tpu.memory_space<vmem>>, vector<1x96xf32>
    %5 = vector.broadcast %4 : vector<1x96xf32> to vector<8x96xf32>
    %6 = arith.addf %3, %5 : vector<8x96xf32>
    %7 = vector.extract_strided_slice %6 {offsets = [0, 0], sizes = [8, 32], strides = [1, 1]} : vector<8x96xf32> to vector<8x32xf32>
    %cst_6 = arith.constant 0.353553385 : f32
    %8 = vector.broadcast %cst_6 : f32 to vector<8x32xf32>
    %9 = arith.mulf %7, %8 : vector<8x32xf32>
    %10 = vector.extract_strided_slice %6 {offsets = [0, 32], sizes = [8, 32], strides = [1, 1]} : vector<8x96xf32> to vector<8x32xf32>
    %11 = vector.extract_strided_slice %6 {offsets = [0, 64], sizes = [8, 32], strides = [1, 1]} : vector<8x96xf32> to vector<8x32xf32>
    %12 = vector.extract_strided_slice %9 {offsets = [0, 0], sizes = [8, 8], strides = [1, 1]} : vector<8x32xf32> to vector<8x8xf32>
    %13 = vector.extract_strided_slice %10 {offsets = [0, 0], sizes = [8, 8], strides = [1, 1]} : vector<8x32xf32> to vector<8x8xf32>
    %14 = vector.extract_strided_slice %11 {offsets = [0, 0], sizes = [8, 8], strides = [1, 1]} : vector<8x32xf32> to vector<8x8xf32>
    %15 = tpu.transpose %13, [1, 0] : vector<8x8xf32> -> vector<8x8xf32>
    %cst_7 = arith.constant dense<0.000000e+00> : vector<8x8xf32>
    %16 = tpu.matmul %12, %15, %cst_7 {dimension_numbers = #tpu.dot_dimension_numbers<[1], [0], [0], [1], [0, 0, 1, 1], [], []>} : vector<8x8xf32>, vector<8x8xf32>, vector<8x8xf32> -> vector<8x8xf32>
    %cst_8 = arith.constant dense<0xFF800000> : vector<8xf32>
    %17 = vector.multi_reduction <maximumf>, %16, %cst_8 [1] : vector<8x8xf32> to vector<8xf32>
    %18 = vector.shape_cast %17 : vector<8xf32> to vector<8x1xf32>
    %19 = vector.broadcast %18 : vector<8x1xf32> to vector<8x8xf32>
    %20 = arith.subf %16, %19 : vector<8x8xf32>
    %21 = math.exp %20 : vector<8x8xf32>
    %cst_9 = arith.constant dense<0.000000e+00> : vector<8xf32>
    %22 = vector.multi_reduction <add>, %21, %cst_9 [1] : vector<8x8xf32> to vector<8xf32>
    %23 = vector.shape_cast %22 : vector<8xf32> to vector<8x1xf32>
    %24 = tpu.reciprocal %23 {approx = true} : vector<8x1xf32> -> vector<8x1xf32>
    %25 = vector.broadcast %24 : vector<8x1xf32> to vector<8x8xf32>
    %26 = arith.mulf %21, %25 : vector<8x8xf32>
    %c0_10 = arith.constant 0 : index
    %c0_11 = arith.constant 0 : index
    %c0_12 = arith.constant 0 : index
    %c0_13 = arith.constant 0 : index
    %27 = vector.load %arg9[%c0_10, %c0_11, %c0_12, %c0_13] : memref<1x4x8x8xf32, #tpu.memory_space<vmem>>, vector<1x1x8x8xf32>
    %28 = vector.shape_cast %27 : vector<1x1x8x8xf32> to vector<8x8xf32>
    %29 = vector.shape_cast %26 : vector<8x8xf32> to vector<1x1x8x8xf32>
    tpu.vector_store %arg9[%c0_10, %c0_11, %c0_12, %c0_13], %29 {strides = array<i32>} : memref<1x4x8x8xf32, #tpu.memory_space<vmem>>, vector<1x1x8x8xf32>,
    %cst_14 = arith.constant dense<0.000000e+00> : vector<8x8xf32>
    %30 = tpu.matmul %26, %14, %cst_14 {dimension_numbers = #tpu.dot_dimension_numbers<[1], [0], [0], [1], [0, 0, 1, 1], [], []>} : vector<8x8xf32>, vector<8x8xf32>, vector<8x8xf32> -> vector<8x8xf32>
    %c0_15 = arith.constant 0 : index
    %c0_16 = arith.constant 0 : index
    %31 = vector.load %arg10[%c0_15, %c0_16] : memref<8x32xf32, #tpu.memory_space<vmem>>, vector<8x8xf32>
    tpu.vector_store %arg10[%c0_15, %c0_16], %30 {strides = array<i32>} : memref<8x32xf32, #tpu.memory_space<vmem>>, vector<8x8xf32>,
    %32 = vector.extract_strided_slice %9 {offsets = [0, 8], sizes = [8, 8], strides = [1, 1]} : vector<8x32xf32> to vector<8x8xf32>
    %33 = vector.extract_strided_slice %10 {offsets = [0, 8], sizes = [8, 8], strides = [1, 1]} : vector<8x32xf32> to vector<8x8xf32>
    %34 = vector.extract_strided_slice %11 {offsets = [0, 8], sizes = [8, 8], strides = [1, 1]} : vector<8x32xf32> to vector<8x8xf32>
    %35 = tpu.transpose %33, [1, 0] : vector<8x8xf32> -> vector<8x8xf32>
    %cst_17 = arith.constant dense<0.000000e+00> : vector<8x8xf32>
    %36 = tpu.matmul %32, %35, %cst_17 {dimension_numbers = #tpu.dot_dimension_numbers<[1], [0], [0], [1], [0, 0, 1, 1], [], []>} : vector<8x8xf32>, vector<8x8xf32>, vector<8x8xf32> -> vector<8x8xf32>
    %cst_18 = arith.constant dense<0xFF800000> : vector<8xf32>
    %37 = vector.multi_reduction <maximumf>, %36, %cst_18 [1] : vector<8x8xf32> to vector<8xf32>
    %38 = vector.shape_cast %37 : vector<8xf32> to vector<8x1xf32>
    %39 = vector.broadcast %38 : vector<8x1xf32> to vector<8x8xf32>
    %40 = arith.subf %36, %39 : vector<8x8xf32>
    %41 = math.exp %40 : vector<8x8xf32>
    %cst_19 = arith.constant dense<0.000000e+00> : vector<8xf32>
    %42 = vector.multi_reduction <add>, %41, %cst_19 [1] : vector<8x8xf32> to vector<8xf32>
    %43 = vector.shape_cast %42 : vector<8xf32> to vector<8x1xf32>
    %44 = tpu.reciprocal %43 {approx = true} : vector<8x1xf32> -> vector<8x1xf32>
    %45 = vector.broadcast %44 : vector<8x1xf32> to vector<8x8xf32>
    %46 = arith.mulf %41, %45 : vector<8x8xf32>
    %c0_20 = arith.constant 0 : index
    %c1 = arith.constant 1 : index
    %c0_21 = arith.constant 0 : index
    %c0_22 = arith.constant 0 : index
    %47 = vector.load %arg9[%c0_20, %c1, %c0_21, %c0_22] : memref<1x4x8x8xf32, #tpu.memory_space<vmem>>, vector<1x1x8x8xf32>
    %48 = vector.shape_cast %47 : vector<1x1x8x8xf32> to vector<8x8xf32>
    %49 = vector.shape_cast %46 : vector<8x8xf32> to vector<1x1x8x8xf32>
    tpu.vector_store %arg9[%c0_20, %c1, %c0_21, %c0_22], %49 {strides = array<i32>} : memref<1x4x8x8xf32, #tpu.memory_space<vmem>>, vector<1x1x8x8xf32>,
    %cst_23 = arith.constant dense<0.000000e+00> : vector<8x8xf32>
    %50 = tpu.matmul %46, %34, %cst_23 {dimension_numbers = #tpu.dot_dimension_numbers<[1], [0], [0], [1], [0, 0, 1, 1], [], []>} : vector<8x8xf32>, vector<8x8xf32>, vector<8x8xf32> -> vector<8x8xf32>
    %c0_24 = arith.constant 0 : index
    %c8 = arith.constant 8 : index
    %51 = vector.load %arg10[%c0_24, %c8] : memref<8x32xf32, #tpu.memory_space<vmem>>, vector<8x8xf32>
    tpu.vector_store %arg10[%c0_24, %c8], %50 {strides = array<i32>} : memref<8x32xf32, #tpu.memory_space<vmem>>, vector<8x8xf32>,
    %52 = vector.extract_strided_slice %9 {offsets = [0, 16], sizes = [8, 8], strides = [1, 1]} : vector<8x32xf32> to vector<8x8xf32>
    %53 = vector.extract_strided_slice %10 {offsets = [0, 16], sizes = [8, 8], strides = [1, 1]} : vector<8x32xf32> to vector<8x8xf32>
    %54 = vector.extract_strided_slice %11 {offsets = [0, 16], sizes = [8, 8], strides = [1, 1]} : vector<8x32xf32> to vector<8x8xf32>
    %55 = tpu.transpose %53, [1, 0] : vector<8x8xf32> -> vector<8x8xf32>
    %cst_25 = arith.constant dense<0.000000e+00> : vector<8x8xf32>
    %56 = tpu.matmul %52, %55, %cst_25 {dimension_numbers = #tpu.dot_dimension_numbers<[1], [0], [0], [1], [0, 0, 1, 1], [], []>} : vector<8x8xf32>, vector<8x8xf32>, vector<8x8xf32> -> vector<8x8xf32>
    %cst_26 = arith.constant dense<0xFF800000> : vector<8xf32>
    %57 = vector.multi_reduction <maximumf>, %56, %cst_26 [1] : vector<8x8xf32> to vector<8xf32>
    %58 = vector.shape_cast %57 : vector<8xf32> to vector<8x1xf32>
    %59 = vector.broadcast %58 : vector<8x1xf32> to vector<8x8xf32>
    %60 = arith.subf %56, %59 : vector<8x8xf32>
    %61 = math.exp %60 : vector<8x8xf32>
    %cst_27 = arith.constant dense<0.000000e+00> : vector<8xf32>
    %62 = vector.multi_reduction <add>, %61, %cst_27 [1] : vector<8x8xf32> to vector<8xf32>
    %63 = vector.shape_cast %62 : vector<8xf32> to vector<8x1xf32>
    %64 = tpu.reciprocal %63 {approx = true} : vector<8x1xf32> -> vector<8x1xf32>
    %65 = vector.broadcast %64 : vector<8x1xf32> to vector<8x8xf32>
    %66 = arith.mulf %61, %65 : vector<8x8xf32>
    %c0_28 = arith.constant 0 : index
    %c2 = arith.constant 2 : index
    %c0_29 = arith.constant 0 : index
    %c0_30 = arith.constant 0 : index
    %67 = vector.load %arg9[%c0_28, %c2, %c0_29, %c0_30] : memref<1x4x8x8xf32, #tpu.memory_space<vmem>>, vector<1x1x8x8xf32>
    %68 = vector.shape_cast %67 : vector<1x1x8x8xf32> to vector<8x8xf32>
    %69 = vector.shape_cast %66 : vector<8x8xf32> to vector<1x1x8x8xf32>
    tpu.vector_store %arg9[%c0_28, %c2, %c0_29, %c0_30], %69 {strides = array<i32>} : memref<1x4x8x8xf32, #tpu.memory_space<vmem>>, vector<1x1x8x8xf32>,
    %cst_31 = arith.constant dense<0.000000e+00> : vector<8x8xf32>
    %70 = tpu.matmul %66, %54, %cst_31 {dimension_numbers = #tpu.dot_dimension_numbers<[1], [0], [0], [1], [0, 0, 1, 1], [], []>} : vector<8x8xf32>, vector<8x8xf32>, vector<8x8xf32> -> vector<8x8xf32>
    %c0_32 = arith.constant 0 : index
    %c16 = arith.constant 16 : index
    %71 = vector.load %arg10[%c0_32, %c16] : memref<8x32xf32, #tpu.memory_space<vmem>>, vector<8x8xf32>
    tpu.vector_store %arg10[%c0_32, %c16], %70 {strides = array<i32>} : memref<8x32xf32, #tpu.memory_space<vmem>>, vector<8x8xf32>,
    %72 = vector.extract_strided_slice %9 {offsets = [0, 24], sizes = [8, 8], strides = [1, 1]} : vector<8x32xf32> to vector<8x8xf32>
    %73 = vector.extract_strided_slice %10 {offsets = [0, 24], sizes = [8, 8], strides = [1, 1]} : vector<8x32xf32> to vector<8x8xf32>
    %74 = vector.extract_strided_slice %11 {offsets = [0, 24], sizes = [8, 8], strides = [1, 1]} : vector<8x32xf32> to vector<8x8xf32>
    %75 = tpu.transpose %73, [1, 0] : vector<8x8xf32> -> vector<8x8xf32>
    %cst_33 = arith.constant dense<0.000000e+00> : vector<8x8xf32>
    %76 = tpu.matmul %72, %75, %cst_33 {dimension_numbers = #tpu.dot_dimension_numbers<[1], [0], [0], [1], [0, 0, 1, 1], [], []>} : vector<8x8xf32>, vector<8x8xf32>, vector<8x8xf32> -> vector<8x8xf32>
    %cst_34 = arith.constant dense<0xFF800000> : vector<8xf32>
    %77 = vector.multi_reduction <maximumf>, %76, %cst_34 [1] : vector<8x8xf32> to vector<8xf32>
    %78 = vector.shape_cast %77 : vector<8xf32> to vector<8x1xf32>
    %79 = vector.broadcast %78 : vector<8x1xf32> to vector<8x8xf32>
    %80 = arith.subf %76, %79 : vector<8x8xf32>
    %81 = math.exp %80 : vector<8x8xf32>
    %cst_35 = arith.constant dense<0.000000e+00> : vector<8xf32>
    %82 = vector.multi_reduction <add>, %81, %cst_35 [1] : vector<8x8xf32> to vector<8xf32>
    %83 = vector.shape_cast %82 : vector<8xf32> to vector<8x1xf32>
    %84 = tpu.reciprocal %83 {approx = true} : vector<8x1xf32> -> vector<8x1xf32>
    %85 = vector.broadcast %84 : vector<8x1xf32> to vector<8x8xf32>
    %86 = arith.mulf %81, %85 : vector<8x8xf32>
    %c0_36 = arith.constant 0 : index
    %c3 = arith.constant 3 : index
    %c0_37 = arith.constant 0 : index
    %c0_38 = arith.constant 0 : index
    %87 = vector.load %arg9[%c0_36, %c3, %c0_37, %c0_38] : memref<1x4x8x8xf32, #tpu.memory_space<vmem>>, vector<1x1x8x8xf32>
    %88 = vector.shape_cast %87 : vector<1x1x8x8xf32> to vector<8x8xf32>
    %89 = vector.shape_cast %86 : vector<8x8xf32> to vector<1x1x8x8xf32>
    tpu.vector_store %arg9[%c0_36, %c3, %c0_37, %c0_38], %89 {strides = array<i32>} : memref<1x4x8x8xf32, #tpu.memory_space<vmem>>, vector<1x1x8x8xf32>,
    %cst_39 = arith.constant dense<0.000000e+00> : vector<8x8xf32>
    %90 = tpu.matmul %86, %74, %cst_39 {dimension_numbers = #tpu.dot_dimension_numbers<[1], [0], [0], [1], [0, 0, 1, 1], [], []>} : vector<8x8xf32>, vector<8x8xf32>, vector<8x8xf32> -> vector<8x8xf32>
    %c0_40 = arith.constant 0 : index
    %c24 = arith.constant 24 : index
    %91 = vector.load %arg10[%c0_40, %c24] : memref<8x32xf32, #tpu.memory_space<vmem>>, vector<8x8xf32>
    tpu.vector_store %arg10[%c0_40, %c24], %90 {strides = array<i32>} : memref<8x32xf32, #tpu.memory_space<vmem>>, vector<8x8xf32>,
    %c0_41 = arith.constant 0 : index
    %c0_42 = arith.constant 0 : index
    %92 = vector.load %arg10[%c0_41, %c0_42] : memref<8x32xf32, #tpu.memory_space<vmem>>, vector<8x32xf32>
    %c0_43 = arith.constant 0 : index
    %c0_44 = arith.constant 0 : index
    %93 = vector.load %arg4[%c0_43, %c0_44] : memref<32x32xf32, #tpu.memory_space<vmem>>, vector<32x32xf32>
    %cst_45 = arith.constant dense<0.000000e+00> : vector<8x32xf32>
    %94 = tpu.matmul %92, %93, %cst_45 {dimension_numbers = #tpu.dot_dimension_numbers<[1], [0], [0], [1], [0, 0, 1, 1], [], []>} : vector<8x32xf32>, vector<32x32xf32>, vector<8x32xf32> -> vector<8x32xf32>
    %c0_46 = arith.constant 0 : index
    %c0_47 = arith.constant 0 : index
    %95 = vector.load %arg5[%c0_46, %c0_47] : memref<1x32xf32, #tpu.memory_space<vmem>>, vector<1x32xf32>
    %96 = vector.broadcast %95 : vector<1x32xf32> to vector<8x32xf32>
    %97 = arith.addf %94, %96 : vector<8x32xf32>
    %98 = arith.addf %97, %1 : vector<8x32xf32>
    %c0_48 = arith.constant 0 : index
    %c0_49 = arith.constant 0 : index
    %99 = vector.load %arg6[%c0_48, %c0_49] : memref<1x32xf32, #tpu.memory_space<vmem>>, vector<1x32xf32>
    %c0_50 = arith.constant 0 : index
    %c0_51 = arith.constant 0 : index
    %100 = vector.load %arg7[%c0_50, %c0_51] : memref<1x32xf32, #tpu.memory_space<vmem>>, vector<1x32xf32>
    %cst_52 = arith.constant dense<0.000000e+00> : vector<8xf32>
    %101 = vector.multi_reduction <add>, %98, %cst_52 [1] : vector<8x32xf32> to vector<8xf32>
    %102 = vector.shape_cast %101 : vector<8xf32> to vector<8x1xf32>
    %cst_53 = arith.constant 3.200000e+01 : f32
    %103 = vector.broadcast %cst_53 : f32 to vector<8x1xf32>
    %104 = arith.divf %102, %103 : vector<8x1xf32>
    %105 = vector.broadcast %104 : vector<8x1xf32> to vector<8x32xf32>
    %106 = arith.subf %98, %105 : vector<8x32xf32>
    %107 = vector.broadcast %104 : vector<8x1xf32> to vector<8x32xf32>
    %108 = arith.subf %98, %107 : vector<8x32xf32>
    %109 = arith.mulf %106, %108 : vector<8x32xf32>
    %cst_54 = arith.constant dense<0.000000e+00> : vector<8xf32>
    %110 = vector.multi_reduction <add>, %109, %cst_54 [1] : vector<8x32xf32> to vector<8xf32>
    %111 = vector.shape_cast %110 : vector<8xf32> to vector<8x1xf32>
    %cst_55 = arith.constant 3.200000e+01 : f32
    %112 = vector.broadcast %cst_55 : f32 to vector<8x1xf32>
    %113 = arith.divf %111, %112 : vector<8x1xf32>
    %114 = vector.broadcast %104 : vector<8x1xf32> to vector<8x32xf32>
    %115 = arith.subf %98, %114 : vector<8x32xf32>
    %cst_56 = arith.constant 9.99999974E-6 : f32
    %116 = vector.broadcast %cst_56 : f32 to vector<8x1xf32>
    %117 = arith.addf %113, %116 : vector<8x1xf32>
    %118 = math.rsqrt %117 : vector<8x1xf32>
    %119 = vector.broadcast %118 : vector<8x1xf32> to vector<8x32xf32>
    %120 = arith.mulf %115, %119 : vector<8x32xf32>
    %121 = vector.broadcast %99 : vector<1x32xf32> to vector<8x32xf32>
    %122 = arith.mulf %120, %121 : vector<8x32xf32>
    %123 = vector.broadcast %100 : vector<1x32xf32> to vector<8x32xf32>
    %124 = arith.addf %122, %123 : vector<8x32xf32>
    %c0_57 = arith.constant 0 : index
    %c0_58 = arith.constant 0 : index
    %c0_59 = arith.constant 0 : index
    %125 = vector.load %arg8[%c0_57, %c0_58, %c0_59] : memref<1x8x32xf32, #tpu.memory_space<vmem>>, vector<1x8x32xf32>
    %126 = vector.shape_cast %125 : vector<1x8x32xf32> to vector<8x32xf32>
    %127 = vector.shape_cast %124 : vector<8x32xf32> to vector<1x8x32xf32>
    tpu.vector_store %arg8[%c0_57, %c0_58, %c0_59], %127 {strides = array<i32>} : memref<1x8x32xf32, #tpu.memory_space<vmem>>, vector<1x8x32xf32>,
    return
  }
  func.func @transform_0(%arg0: i32) -> (i32, i32, i32) {
    %c0_i32 = arith.constant 0 : i32
    %c0_i32_0 = arith.constant 0 : i32
    %c0_i32_1 = arith.constant 0 : i32
    return %arg0, %c0_i32, %c0_i32_0 : i32, i32, i32
  }
  func.func @transform_1(%arg0: i32) -> (i32, i32) {
    %c0_i32 = arith.constant 0 : i32
    %c0_i32_0 = arith.constant 0 : i32
    %c0_i32_1 = arith.constant 0 : i32
    return %c0_i32, %c0_i32_0 : i32, i32
  }
  func.func @transform_2(%arg0: i32) -> (i32, i32) {
    %c0_i32 = arith.constant 0 : i32
    %c0_i32_0 = arith.constant 0 : i32
    %c0_i32_1 = arith.constant 0 : i32
    return %c0_i32, %c0_i32_0 : i32, i32
  }
  func.func @transform_3(%arg0: i32) -> (i32, i32) {
    %c0_i32 = arith.constant 0 : i32
    %c0_i32_0 = arith.constant 0 : i32
    %c0_i32_1 = arith.constant 0 : i32
    return %c0_i32, %c0_i32_0 : i32, i32
  }
  func.func @transform_4(%arg0: i32) -> (i32, i32) {
    %c0_i32 = arith.constant 0 : i32
    %c0_i32_0 = arith.constant 0 : i32
    %c0_i32_1 = arith.constant 0 : i32
    return %c0_i32, %c0_i32_0 : i32, i32
  }
  func.func @transform_5(%arg0: i32) -> (i32, i32) {
    %c0_i32 = arith.constant 0 : i32
    %c0_i32_0 = arith.constant 0 : i32
    %c0_i32_1 = arith.constant 0 : i32
    return %c0_i32, %c0_i32_0 : i32, i32
  }
  func.func @transform_6(%arg0: i32) -> (i32, i32) {
    %c0_i32 = arith.constant 0 : i32
    %c0_i32_0 = arith.constant 0 : i32
    %c0_i32_1 = arith.constant 0 : i32
    return %c0_i32, %c0_i32_0 : i32, i32
  }
  func.func @transform_7(%arg0: i32) -> (i32, i32, i32) {
    %c0_i32 = arith.constant 0 : i32
    %c0_i32_0 = arith.constant 0 : i32
    %c0_i32_1 = arith.constant 0 : i32
    return %arg0, %c0_i32, %c0_i32_0 : i32, i32, i32
  }
  func.func @transform_8(%arg0: i32) -> (i32, i32, i32, i32) {
    %c0_i32 = arith.constant 0 : i32
    %c0_i32_0 = arith.constant 0 : i32
    %c0_i32_1 = arith.constant 0 : i32
    %c0_i32_2 = arith.constant 0 : i32
    return %arg0, %c0_i32, %c0_i32_0, %c0_i32_1 : i32, i32, i32, i32
  }
}

</mosaic_0001>

<llo_original>
// kernel: tpu_custom_call.1
$region0: #{tpu_custom_call.1}
  #allocation0 [shape = 'u32[]', space=smem, size = 0x4, offset = 0x4, fixed_abs, tag = 'smem constant byte address 0x4 - core index']
  #allocation1 [shape = 'u32[144,128]{1,0:T(1,128)}', space=vmem, size = 0x12000, scoped, tag = 'internal scratch']
  #allocation2 [shape = 'f32[8,32]{1,0:T(8,128)}', space=vmem, size = 0x1000, scoped, tag = 'scratch operand']
  %s0 = inlined_call_operand.hbm [shape: f32[2,8,32], index: 0, kind: input, shape index: {}]
  %s1 = inlined_call_operand.hbm [shape: f32[32,96], index: 1, kind: input, shape index: {}]
  %s2 = inlined_call_operand.vmem [shape: f32[1,96], index: 2, kind: input, shape index: {}]
  %s3 = inlined_call_operand.hbm [shape: f32[32,32], index: 3, kind: input, shape index: {}]
  %s4 = inlined_call_operand.vmem [shape: f32[1,32], index: 4, kind: input, shape index: {}]
  %s5 = inlined_call_operand.vmem [shape: f32[1,32], index: 5, kind: input, shape index: {}]
  %s6 = inlined_call_operand.vmem [shape: f32[1,32], index: 6, kind: input, shape index: {}]
  %s7 = inlined_call_operand.hbm [shape: f32[2,8,32], index: 7, kind: output, shape index: {0}]
  %s8 = inlined_call_operand.hbm [shape: f32[2,4,8,8], index: 8, kind: output, shape index: {1}]
  %9 = xla_tuple %s7, %s8
  %s10 = sld [smem:[#allocation0]]
  $region81: #{tpu_custom_call.1} parent=0
    _
  %s12 = ssub.s32 1, %s10
  %s13 = scalar_select 0, %s12, %s10
  $region1: #{tpu_custom_call.1} parent=0
    #allocation3 [shape = 'u8[8192]{0}', space=vmem, size = 0x2000, scoped, tag = 'input window, operand 0']
    #allocation4 [shape = 's32[2]{0}', space=sflag, size = 0x8, scoped, tag = 'scoped memory for tpu_custom_call.1']
    #allocation5 [shape = 's32[2]{0}', space=sflag, size = 0x8, scoped, tag = 'scoped memory for tpu_custom_call.1']
    #allocation6 [shape = 'u8[16384]{0}', space=vmem, size = 0x4000, scoped, tag = 'input window, operand 1, single buffered']
    #allocation7 [shape = 's32[1]{0}', space=sflag, size = 0x4, scoped, tag = 'scoped memory for tpu_custom_call.1']
    #allocation8 [shape = 'u8[16384]{0}', space=vmem, size = 0x4000, scoped, tag = 'input window, operand 3, single buffered']
    #allocation9 [shape = 'u8[8192]{0}', space=vmem, size = 0x2000, scoped, tag = 'output window, operand 0']
    #allocation10 [shape = 'u8[32768]{0}', space=vmem, size = 0x8000, scoped, tag = 'output window, operand 1']
    #allocation11 [shape = 's32[2]{0}', space=sflag, size = 0x8, scoped, tag = 'scoped memory for tpu_custom_call.1']
    %14 = vsyncpa [#allocation4], 0
    %s15 = scalar_lea.sflag [#allocation4], 1
    %16 = vsyncpa %s15, 0
    %17 = vsyncpa [#allocation7], 0
    %18 = vsyncpa [#allocation5], 0
    %s19 = scalar_lea.sflag [#allocation5], 1
    %20 = vsyncpa %s19, 0
    %21 = vsyncpa [#allocation11], 0
    %s22 = scalar_lea.sflag [#allocation11], 1
    %23 = vsyncpa %s22, 0
    loop: start=0, step=1, limit=4
    $region2: #{tpu_custom_call.1} parent=1 // loop_pre_header
      _
    $region3: #{tpu_custom_call.1} parent=1 // loop_header
      %s25 = sphi 0, %s29
      %p26 = scmp.ge.s32.totalorder %s25, 4
      %s35 = sphi 0, %s37
      %s38 = sphi 0, %s35
      %s39 = sphi 0, %s38
      %s55 = sphi 0, %s39
      %s59 = sphi 0, %s59
      %s61 = sphi 0, %s59
      %s62 = sphi 0, %s61
      %s76 = sphi 0, %s62
      %s80 = sphi 0, %s80
      %s82 = sphi 0, %s80
      %s83 = sphi 0, %s82
      %s97 = sphi 0, %s83
      %s101 = sphi 0, %s101
      %s103 = sphi 0, %s101
      %s104 = sphi 0, %s103
      %s118 = sphi 0, %s104
      %s122 = sphi 0, %s122
      %s124 = sphi 0, %s122
      %s125 = sphi 0, %s124
      %s139 = sphi 0, %s125
      %s143 = sphi 0, %s143
      %s145 = sphi 0, %s143
      %s146 = sphi 0, %s145
      %s160 = sphi 0, %s146
      %s164 = sphi 0, %s164
      %s166 = sphi 0, %s164
      %s167 = sphi 0, %s166
      %s181 = sphi 0, %s167
      %s187 = sphi 0, %s189
      %s190 = sphi 0, %s187
      %s191 = sphi 0, %s190
      %s207 = sphi 0, %s191
      %s213 = sphi 0, %s215
      %s216 = sphi 0, %s213
      %s217 = sphi 0, %s216
      %s233 = sphi 0, %s217
    $region4: #{tpu_custom_call.1} parent=1 // loop_header_branch
      %28 = sbr.rel (%p26) target = $region8
    $region5: #{tpu_custom_call.1} parent=1 // loop_body
      %s30 = ssub.s32 %s25, 1
      %s31 = ssub.s32 %s25, 2
      %s32 = sadd.s32 %s25, 1
      %s33 = ssub.s32 %s25, %s32
      %p34 = scmp.eq.s32.totalorder %s33, 0
      %s36 = sadd.s32 %s35, 1
      %s37 = scalar_select %p34, %s35, %s36
      %p40 = pneg %p34
      %p41 = scmp.eq.s32.totalorder %s25, 1
      %p42 = por %p40, %p41
      %p43 = scmp.ne.s32.totalorder %s35, %s38
      %p44 = scmp.eq.s32.totalorder %s25, 0
      %p45 = por %p43, %p44
      %p46 = scmp.ne.s32.totalorder %s35, %s38
      %p47 = scmp.eq.s32.totalorder %s30, 1
      %p48 = por %p46, %p47
      %p49 = scmp.ne.s32.totalorder %s38, %s39
      %p50 = scmp.eq.s32.totalorder %s30, 0
      %p51 = por %p49, %p50
      %p52 = scmp.ne.s32.totalorder %s38, %s39
      %p53 = scmp.eq.s32.totalorder %s31, 1
      %p54 = por %p52, %p53
      %p56 = scmp.ne.s32.totalorder %s39, %s55
      %p57 = scmp.eq.s32.totalorder %s31, 0
      %p58 = por %p56, %p57
      %s60 = sadd.s32 %s59, 1
      %p63 = scmp.eq.s32.totalorder %s25, 1
      %p64 = scmp.ne.s32.totalorder %s59, %s61
      %p65 = scmp.eq.s32.totalorder %s25, 0
      %p66 = por %p64, %p65
      %p67 = scmp.ne.s32.totalorder %s59, %s61
      %p68 = scmp.eq.s32.totalorder %s30, 1
      %p69 = por %p67, %p68
      %p70 = scmp.ne.s32.totalorder %s61, %s62
      %p71 = scmp.eq.s32.totalorder %s30, 0
      %p72 = por %p70, %p71
      %p73 = scmp.ne.s32.totalorder %s61, %s62
      %p74 = scmp.eq.s32.totalorder %s31, 1
      %p75 = por %p73, %p74
      %p77 = scmp.ne.s32.totalorder %s62, %s76
      %p78 = scmp.eq.s32.totalorder %s31, 0
      %p79 = por %p77, %p78
      %s81 = sadd.s32 %s80, 1
      %p84 = scmp.eq.s32.totalorder %s25, 1
      %p85 = scmp.ne.s32.totalorder %s80, %s82
      %p86 = scmp.eq.s32.totalorder %s25, 0
      %p87 = por %p85, %p86
      %p88 = scmp.ne.s32.totalorder %s80, %s82
      %p89 = scmp.eq.s32.totalorder %s30, 1
      %p90 = por %p88, %p89
      %p91 = scmp.ne.s32.totalorder %s82, %s83
      %p92 = scmp.eq.s32.totalorder %s30, 0
      %p93 = por %p91, %p92
      %p94 = scmp.ne.s32.totalorder %s82, %s83
      %p95 = scmp.eq.s32.totalorder %s31, 1
      %p96 = por %p94, %p95
      %p98 = scmp.ne.s32.totalorder %s83, %s97
      %p99 = scmp.eq.s32.totalorder %s31, 0
      %p100 = por %p98, %p99
      %s102 = sadd.s32 %s101, 1
      %p105 = scmp.eq.s32.totalorder %s25, 1
      %p106 = scmp.ne.s32.totalorder %s101, %s103
      %p107 = scmp.eq.s32.totalorder %s25, 0
      %p108 = por %p106, %p107
      %p109 = scmp.ne.s32.totalorder %s101, %s103
      %p110 = scmp.eq.s32.totalorder %s30, 1
      %p111 = por %p109, %p110
      %p112 = scmp.ne.s32.totalorder %s103, %s104
      %p113 = scmp.eq.s32.totalorder %s30, 0
      %p114 = por %p112, %p113
      %p115 = scmp.ne.s32.totalorder %s103, %s104
      %p116 = scmp.eq.s32.totalorder %s31, 1
      %p117 = por %p115, %p116
      %p119 = scmp.ne.s32.totalorder %s104, %s118
      %p120 = scmp.eq.s32.totalorder %s31, 0
      %p121 = por %p119, %p120
      %s123 = sadd.s32 %s122, 1
      %p126 = scmp.eq.s32.totalorder %s25, 1
      %p127 = scmp.ne.s32.totalorder %s122, %s124
      %p128 = scmp.eq.s32.totalorder %s25, 0
      %p129 = por %p127, %p128
      %p130 = scmp.ne.s32.totalorder %s122, %s124
      %p131 = scmp.eq.s32.totalorder %s30, 1
      %p132 = por %p130, %p131
      %p133 = scmp.ne.s32.totalorder %s124, %s125
      %p134 = scmp.eq.s32.totalorder %s30, 0
      %p135 = por %p133, %p134
      %p136 = scmp.ne.s32.totalorder %s124, %s125
      %p137 = scmp.eq.s32.totalorder %s31, 1
      %p138 = por %p136, %p137
      %p140 = scmp.ne.s32.totalorder %s125, %s139
      %p141 = scmp.eq.s32.totalorder %s31, 0
      %p142 = por %p140, %p141
      %s144 = sadd.s32 %s143, 1
      %p147 = scmp.eq.s32.totalorder %s25, 1
      %p148 = scmp.ne.s32.totalorder %s143, %s145
      %p149 = scmp.eq.s32.totalorder %s25, 0
      %p150 = por %p148, %p149
      %p151 = scmp.ne.s32.totalorder %s143, %s145
      %p152 = scmp.eq.s32.totalorder %s30, 1
      %p153 = por %p151, %p152
      %p154 = scmp.ne.s32.totalorder %s145, %s146
      %p155 = scmp.eq.s32.totalorder %s30, 0
      %p156 = por %p154, %p155
      %p157 = scmp.ne.s32.totalorder %s145, %s146
      %p158 = scmp.eq.s32.totalorder %s31, 1
      %p159 = por %p157, %p158
      %p161 = scmp.ne.s32.totalorder %s146, %s160
      %p162 = scmp.eq.s32.totalorder %s31, 0
      %p163 = por %p161, %p162
      %s165 = sadd.s32 %s164, 1
      %p168 = scmp.eq.s32.totalorder %s25, 1
      %p169 = scmp.ne.s32.totalorder %s164, %s166
      %p170 = scmp.eq.s32.totalorder %s25, 0
      %p171 = por %p169, %p170
      %p172 = scmp.ne.s32.totalorder %s164, %s166
      %p173 = scmp.eq.s32.totalorder %s30, 1
      %p174 = por %p172, %p173
      %p175 = scmp.ne.s32.totalorder %s166, %s167
      %p176 = scmp.eq.s32.totalorder %s30, 0
      %p177 = por %p175, %p176
      %p178 = scmp.ne.s32.totalorder %s166, %s167
      %p179 = scmp.eq.s32.totalorder %s31, 1
      %p180 = por %p178, %p179
      %p182 = scmp.ne.s32.totalorder %s167, %s181
      %p183 = scmp.eq.s32.totalorder %s31, 0
      %p184 = por %p182, %p183
      %s185 = ssub.s32 %s25, %s32
      %p186 = scmp.eq.s32.totalorder %s185, 0
      %s188 = sadd.s32 %s187, 1
      %s189 = scalar_select %p186, %s187, %s188
      %p192 = pneg %p186
      %p193 = scmp.eq.s32.totalorder %s25, 1
      %p194 = por %p192, %p193
      %p195 = scmp.ne.s32.totalorder %s187, %s190
      %p196 = scmp.eq.s32.totalorder %s25, 0
      %p197 = por %p195, %p196
      %p198 = scmp.ne.s32.totalorder %s187, %s190
      %p199 = scmp.eq.s32.totalorder %s30, 1
      %p200 = por %p198, %p199
      %p201 = scmp.ne.s32.totalorder %s190, %s191
      %p202 = scmp.eq.s32.totalorder %s30, 0
      %p203 = por %p201, %p202
      %p204 = scmp.ne.s32.totalorder %s190, %s191
      %p205 = scmp.eq.s32.totalorder %s31, 1
      %p206 = por %p204, %p205
      %p208 = scmp.ne.s32.totalorder %s191, %s207
      %p209 = scmp.eq.s32.totalorder %s31, 0
      %p210 = por %p208, %p209
      %s211 = ssub.s32 %s25, %s32
      %p212 = scmp.eq.s32.totalorder %s211, 0
      %s214 = sadd.s32 %s213, 1
      %s215 = scalar_select %p212, %s213, %s214
      %p218 = pneg %p212
      %p219 = scmp.eq.s32.totalorder %s25, 1
      %p220 = por %p218, %p219
      %p221 = scmp.ne.s32.totalorder %s213, %s216
      %p222 = scmp.eq.s32.totalorder %s25, 0
      %p223 = por %p221, %p222
      %p224 = scmp.ne.s32.totalorder %s213, %s216
      %p225 = scmp.eq.s32.totalorder %s30, 1
      %p226 = por %p224, %p225
      %p227 = scmp.ne.s32.totalorder %s216, %s217
      %p228 = scmp.eq.s32.totalorder %s30, 0
      %p229 = por %p227, %p228
      %p230 = scmp.ne.s32.totalorder %s216, %s217
      %p231 = scmp.eq.s32.totalorder %s31, 1
      %p232 = por %p230, %p231
      %p234 = scmp.ne.s32.totalorder %s217, %s233
      %p235 = scmp.eq.s32.totalorder %s31, 0
      %p236 = por %p234, %p235
      %p237 = scmp.le.s32.totalorder 1, %s25
      %p238 = scmp.lt.s32.totalorder %s25, 3
      %p239 = pnand %p237, %p238
      %p240 = pneg %p239
      // Predicated region
      $region9: #{tpu_custom_call.1} parent=5 // pred_check
        _
      $region10: #{tpu_custom_call.1} parent=5 // pred_check_branch
        %242 = sbr.rel (%p239) target = $region12
      $region11: #{tpu_custom_call.1} parent=5 // pred_region
        %s243 = ssub.s32 %s25, 1
        // Predicated region
        $region13: #{tpu_custom_call.1} parent=11 // pred_check
          %p244 = pneg %p72
        $region14: #{tpu_custom_call.1} parent=11 // pred_check_branch
          %246 = sbr.rel (%p244) target = $region16
        $region15: #{tpu_custom_call.1} parent=11 // pred_region
          %s248 = ssub.s32 512, 512
          %249 = vsyncadd [#allocation7], %s248
          %s250 = sshll.u32 [#allocation6], 4
          %s251 = int_to_ptr.vmem [resolvable:$true] %s250
          %256 = dma.hbm_to_vmem [thread:$0]  %s1, 512, %s251, [#allocation7], 128, 128, 8
        $region16: #{tpu_custom_call.1} parent=11 // pred_fallthru
          _
        // Predicated region
        $region17: #{tpu_custom_call.1} parent=11 // pred_check
          %p257 = pneg %p93
        $region18: #{tpu_custom_call.1} parent=11 // pred_check_branch
          %259 = sbr.rel (%p257) target = $region20
        $region19: #{tpu_custom_call.1} parent=11 // pred_region
          _
        $region20: #{tpu_custom_call.1} parent=11 // pred_fallthru
          _
        // Predicated region
        $region21: #{tpu_custom_call.1} parent=11 // pred_check
          %p260 = pneg %p114
        $region22: #{tpu_custom_call.1} parent=11 // pred_check_branch
          %262 = sbr.rel (%p260) target = $region24
        $region23: #{tpu_custom_call.1} parent=11 // pred_region
          %s264 = ssub.s32 512, 512
          %265 = vsyncadd [#allocation7], %s264
          %s266 = sshll.u32 [#allocation8], 4
          %s267 = int_to_ptr.vmem [resolvable:$true] %s266
          %272 = dma.hbm_to_vmem [thread:$0]  %s3, 512, %s267, [#allocation7], 128, 128, 8
        $region24: #{tpu_custom_call.1} parent=11 // pred_fallthru
          _
        // Predicated region
        $region25: #{tpu_custom_call.1} parent=11 // pred_check
          %p273 = pneg %p135
        $region26: #{tpu_custom_call.1} parent=11 // pred_check_branch
          %275 = sbr.rel (%p273) target = $region28
        $region27: #{tpu_custom_call.1} parent=11 // pred_region
          _
        $region28: #{tpu_custom_call.1} parent=11 // pred_fallthru
          _
        // Predicated region
        $region29: #{tpu_custom_call.1} parent=11 // pred_check
          %p276 = pneg %p156
        $region30: #{tpu_custom_call.1} parent=11 // pred_check_branch
          %278 = sbr.rel (%p276) target = $region32
        $region31: #{tpu_custom_call.1} parent=11 // pred_region
          _
        $region32: #{tpu_custom_call.1} parent=11 // pred_fallthru
          _
        // Predicated region
        $region33: #{tpu_custom_call.1} parent=11 // pred_check
          %p279 = pneg %p177
        $region34: #{tpu_custom_call.1} parent=11 // pred_check_branch
          %281 = sbr.rel (%p279) target = $region36
        $region35: #{tpu_custom_call.1} parent=11 // pred_region
          _
        $region36: #{tpu_custom_call.1} parent=11 // pred_fallthru
          _
      $region12: #{tpu_custom_call.1} parent=5 // pred_fallthru
        _
      %p282 = scmp.lt.s32.totalorder %s25, 2
      // Predicated region
      $region37: #{tpu_custom_call.1} parent=5 // pred_check
        %p283 = pneg %p282
      $region38: #{tpu_custom_call.1} parent=5 // pred_check_branch
        %285 = sbr.rel (%p283) target = $region40
      $region39: #{tpu_custom_call.1} parent=5 // pred_region
        // Predicated region
        $region41: #{tpu_custom_call.1} parent=39 // pred_check
          %p286 = pneg %p45
        $region42: #{tpu_custom_call.1} parent=39 // pred_check_branch
          %288 = sbr.rel (%p286) target = $region44
        $region43: #{tpu_custom_call.1} parent=39 // pred_region
          %s289 = sand.u32 %s35, 1
          %s290 = scalar_lea.sflag [#allocation4], %s289
          %s291 = sand.u32 %s35, 1
          %s292 = smul.addr %s291, 8
          %s293 = scalar_lea.vmem [#allocation3], %s292
          %s295 = ssub.s32 128, 128
          %296 = vsyncadd %s290, %s295
          %s297 = smul.addr %s25, 128
          %s298 = scalar_lea.hbm %s0, %s297
          %s300 = sshll.u32 %s293, 4
          %s301 = int_to_ptr.vmem [resolvable:$true] %s300
          %303 = dma.hbm_to_vmem [thread:$0]  %s298, 128, %s301, %s290
        $region44: #{tpu_custom_call.1} parent=39 // pred_fallthru
          _
      $region40: #{tpu_custom_call.1} parent=5 // pred_fallthru
        _
      %p304 = scmp.le.s32.totalorder 1, %s25
      %p305 = scmp.lt.s32.totalorder %s25, 3
      %p306 = pnand %p304, %p305
      %p307 = pneg %p306
      // Predicated region
      $region45: #{tpu_custom_call.1} parent=5 // pred_check
        _
      $region46: #{tpu_custom_call.1} parent=5 // pred_check_branch
        %309 = sbr.rel (%p306) target = $region48
      $region47: #{tpu_custom_call.1} parent=5 // pred_region
        %s310 = ssub.s32 %s25, 1
        %s311 = sand.u32 %s38, 1
        %s312 = scalar_lea.sflag [#allocation4], %s311
        %s313 = sand.u32 %s38, 1
        %s314 = smul.addr %s313, 8
        %s315 = scalar_lea.vmem [#allocation3], %s314
        // Predicated region
        $region49: #{tpu_custom_call.1} parent=47 // pred_check
          %p316 = pneg %p51
        $region50: #{tpu_custom_call.1} parent=47 // pred_check_branch
          %318 = sbr.rel (%p316) target = $region52
        $region51: #{tpu_custom_call.1} parent=47 // pred_region
          %319 = dma.done %s312, 128
        $region52: #{tpu_custom_call.1} parent=47 // pred_fallthru
          _
        // Predicated region
        $region53: #{tpu_custom_call.1} parent=47 // pred_check
          %p320 = pneg %p72
        $region54: #{tpu_custom_call.1} parent=47 // pred_check_branch
          %322 = sbr.rel (%p320) target = $region56
        $region55: #{tpu_custom_call.1} parent=47 // pred_region
          %323 = dma.done [#allocation7], 512
        $region56: #{tpu_custom_call.1} parent=47 // pred_fallthru
          _
        // Predicated region
        $region57: #{tpu_custom_call.1} parent=47 // pred_check
          %p324 = pneg %p114
        $region58: #{tpu_custom_call.1} parent=47 // pred_check_branch
          %326 = sbr.rel (%p324) target = $region60
        $region59: #{tpu_custom_call.1} parent=47 // pred_region
          %327 = dma.done [#allocation7], 512
        $region60: #{tpu_custom_call.1} parent=47 // pred_fallthru
          _
        %s328 = sand.u32 %s38, 1
        %s329 = scalar_lea.sflag [#allocation4], %s328
        %s330 = sand.u32 %s38, 1
        %s331 = smul.addr %s330, 8
        %s332 = scalar_lea.vmem [#allocation3], %s331
        %p333 = pneg %p51
        %p334 = pneg %p48
        %p335 = pneg %p72
        %p336 = pneg %p69
        %p337 = pneg %p93
        %p338 = pneg %p90
        %p339 = pneg %p114
        %p340 = pneg %p111
        %p341 = pneg %p135
        %p342 = pneg %p132
        %p343 = pneg %p156
        %p344 = pneg %p153
        %p345 = pneg %p177
        %p346 = pneg %p174
        %p347 = pneg %p203
        %p348 = pneg %p200
        %s349 = sand.u32 %s190, 1
        %s350 = scalar_lea.sflag [#allocation5], %s349
        %s351 = sand.u32 %s190, 1
        %s352 = smul.addr %s351, 8
        %s353 = scalar_lea.vmem [#allocation9], %s352
        %p354 = pneg %p229
        %p355 = pneg %p226
        %s356 = sand.u32 %s216, 1
        %s357 = scalar_lea.sflag [#allocation11], %s356
        %s358 = sand.u32 %s216, 1
        %s359 = smul.addr %s358, 32
        %s360 = scalar_lea.vmem [#allocation10], %s359
        %v361 = vld [vmem:[%s315] sm:$0xff]
        %v362 = vld [vmem:[#allocation6] sm:$0xff]
        %v363 = vld [vmem:[#allocation6 + $0x8] sm:$0xff]
        %v364 = vld [vmem:[#allocation6 + $0x10] sm:$0xff]
        %v365 = vld [vmem:[#allocation6 + $0x18] sm:$0xff]
        %v366 = vld [vmem:[%s2] sm:$0x1]
        %v368 = vlaneseq
        %v369 = vshrl.u32 %v368, 7
        %v370 = vsub.s32 0, %v369
        %v371 = vrot.slane %v366, %v370
        %vm373 = vcmask 261120
        %v375 = vsel %vm373, %v361, 0
        %377 = vmatprep.subr.mxu0 0.0
        %378 = vmatpush1.msra.mxu0 %v362
        %379 = vmatprep.subr.mxu0 0.0
        %380 = vmatpush1.msra.mxu0 %v363
        %381 = vmatprep.subr.mxu0 0.0
        %382 = vmatpush1.msra.mxu0 %v364
        %383 = vmatprep.subr.mxu0 0.0
        %384 = vmatpush1.msra.mxu0 %v365
        %385 = vmatprep.subr.mxu0 0.0
        %386 = vmatpush1.msra.mxu0 0.0
        %387 = vmatprep.subr.mxu0 0.0
        %388 = vmatpush1.msra.mxu0 0.0
        %389 = vmatprep.subr.mxu0 0.0
        %390 = vmatpush1.msra.mxu0 0.0
        %391 = vmatprep.subr.mxu0 0.0
        %392 = vmatpush1.msra.mxu0 0.0
        %393 = vmatprep.subr.mxu0 0.0
        %394 = vmatpush1.msra.mxu0 0.0
        %395 = vmatprep.subr.mxu0 0.0
        %396 = vmatpush1.msra.mxu0 0.0
        %397 = vmatprep.subr.mxu0 0.0
        %398 = vmatpush1.msra.mxu0 0.0
        %399 = vmatprep.subr.mxu0 0.0
        %400 = vmatpush1.msra.mxu0 0.0
        %401 = vmatprep.subr.mxu0 0.0
        %402 = vmatpush1.msra.mxu0 0.0
        %403 = vmatprep.subr.mxu0 0.0
        %404 = vmatpush1.msra.mxu0 0.0
        %405 = vmatprep.subr.mxu0 0.0
        %406 = vmatpush1.msra.mxu0 0.0
        %407 = vmatprep.subr.mxu0 0.0
        %408 = vmatpush1.msra.mxu0 0.0
        %409 = vmatprep.subr.mxu0 0.0
        %410 = vmatpush1.msra.mxu0 0.0
        %411 = vmatprep.subr.mxu0 0.0
        %412 = vmatpush1.msra.mxu0 0.0
        %413 = vmatprep.subr.mxu0 0.0
        %414 = vmatpush1.msra.mxu0 0.0
        %415 = vmatprep.subr.mxu0 0.0
        %416 = vmatpush1.msra.mxu0 0.0
        %417 = vmatprep.subr.mxu0 0.0
        %418 = vmatpush1.msra.mxu0 0.0
        %419 = vmatprep.subr.mxu0 0.0
        %420 = vmatpush1.msra.mxu0 0.0
        %421 = vmatprep.subr.mxu0 0.0
        %422 = vmatpush1.msra.mxu0 0.0
        %423 = vmatprep.subr.mxu0 0.0
        %424 = vmatpush1.msra.mxu0 0.0
        %425 = vmatprep.subr.mxu0 0.0
        %426 = vmatpush1.msra.mxu0 0.0
        %427 = vmatprep.subr.mxu0 0.0
        %428 = vmatpush1.msra.mxu0 0.0
        %429 = vmatprep.subr.mxu0 0.0
        %430 = vmatpush1.msra.mxu0 0.0
        %431 = vmatprep.subr.mxu0 0.0
        %432 = vmatpush1.msra.mxu0 0.0
        %433 = vmatprep.subr.mxu0 0.0
        %434 = vmatpush1.msra.mxu0 0.0
        %435 = vmatprep.subr.mxu0 0.0
        %436 = vmatpush1.msra.mxu0 0.0
        %437 = vmatprep.subr.mxu0 0.0
        %438 = vmatpush1.msra.mxu0 0.0
        %439 = vmatprep.subr.mxu0 0.0
        %440 = vmatpush1.msra.mxu0 0.0
        %441 = vmatprep.mubr.f32.mxu0 0.0
        %442 = vmatmul.mubr.f32.gmra.mrb[0].mxu0 %v375
        %v443 = vpop.f32.mrb[0].mxu0
        %v444 = vadd.f32 %v371, %v443
        %v445 = vpop.f32.mrb[0].mxu0
        %446 = vdwg.mxu0
        %v447 = vmul.f32 %v444, 0.35355338
        %449 = vrot.lane.b32.xlu0 %v444, 96
        %v450 = vpop.permute.xlu0 %449
        %vm451 = vcmask 64512
        %v453 = vsel %vm451, %v447, 0
        %v455 = vsel %vm451, %v450, 0
        %457 = vmatprep.subr.mxu0 0.0
        %458 = vmatpush1.xpose.msra.mxu0 %v455
        %459 = vmatprep.subr.mxu0 0.0
        %460 = vmatpush1.xpose.msra.mxu0 0.0
        %461 = vmatprep.subr.mxu0 0.0
        %462 = vmatpush1.xpose.msra.mxu0 0.0
        %463 = vmatprep.subr.mxu0 0.0
        %464 = vmatpush1.xpose.msra.mxu0 0.0
        %465 = vmatprep.subr.mxu0 0.0
        %466 = vmatpush1.xpose.msra.mxu0 0.0
        %467 = vmatprep.subr.mxu0 0.0
        %468 = vmatpush1.xpose.msra.mxu0 0.0
        %469 = vmatprep.subr.mxu0 0.0
        %470 = vmatpush1.xpose.msra.mxu0 0.0
        %471 = vmatprep.subr.mxu0 0.0
        %472 = vmatpush1.xpose.msra.mxu0 0.0
        %473 = vmatprep.subr.mxu0 0.0
        %474 = vmatpush1.xpose.msra.mxu0 0.0
        %475 = vmatprep.subr.mxu0 0.0
        %476 = vmatpush1.xpose.msra.mxu0 0.0
        %477 = vmatprep.subr.mxu0 0.0
        %478 = vmatpush1.xpose.msra.mxu0 0.0
        %479 = vmatprep.subr.mxu0 0.0
        %480 = vmatpush1.xpose.msra.mxu0 0.0
        %481 = vmatprep.subr.mxu0 0.0
        %482 = vmatpush1.xpose.msra.mxu0 0.0
        %483 = vmatprep.subr.mxu0 0.0
        %484 = vmatpush1.xpose.msra.mxu0 0.0
        %485 = vmatprep.subr.mxu0 0.0
        %486 = vmatpush1.xpose.msra.mxu0 0.0
        %487 = vmatprep.subr.mxu0 0.0
        %488 = vmatpush1.xpose.msra.mxu0 0.0
        %489 = vmatprep.subr.mxu0 0.0
        %490 = vmatpush1.xpose.msra.mxu0 0.0
        %491 = vmatprep.subr.mxu0 0.0
        %492 = vmatpush1.xpose.msra.mxu0 0.0
        %493 = vmatprep.subr.mxu0 0.0
        %494 = vmatpush1.xpose.msra.mxu0 0.0
        %495 = vmatprep.subr.mxu0 0.0
        %496 = vmatpush1.xpose.msra.mxu0 0.0
        %497 = vmatprep.subr.mxu0 0.0
        %498 = vmatpush1.xpose.msra.mxu0 0.0
        %499 = vmatprep.subr.mxu0 0.0
        %500 = vmatpush1.xpose.msra.mxu0 0.0
        %501 = vmatprep.subr.mxu0 0.0
        %502 = vmatpush1.xpose.msra.mxu0 0.0
        %503 = vmatprep.subr.mxu0 0.0
        %504 = vmatpush1.xpose.msra.mxu0 0.0
        %505 = vmatprep.subr.mxu0 0.0
        %506 = vmatpush1.xpose.msra.mxu0 0.0
        %507 = vmatprep.subr.mxu0 0.0
        %508 = vmatpush1.xpose.msra.mxu0 0.0
        %509 = vmatprep.subr.mxu0 0.0
        %510 = vmatpush1.xpose.msra.mxu0 0.0
        %511 = vmatprep.subr.mxu0 0.0
        %512 = vmatpush1.xpose.msra.mxu0 0.0
        %513 = vmatprep.subr.mxu0 0.0
        %514 = vmatpush1.xpose.msra.mxu0 0.0
        %515 = vmatprep.subr.mxu0 0.0
        %516 = vmatpush1.xpose.msra.mxu0 0.0
        %517 = vmatprep.subr.mxu0 0.0
        %518 = vmatpush1.xpose.msra.mxu0 0.0
        %519 = vmatprep.subr.mxu0 0.0
        %520 = vmatpush1.xpose.msra.mxu0 0.0
        %521 = vmatprep.mubr.f32.mxu0 0.0
        %522 = vmatmul.mubr.f32.gmra.mrb[0].mxu0 %v453
        %v523 = vpop.f32.mrb[0].mxu0
        %v524 = vadd.f32 0.0, %v523
        %v525 = vpop.f32.mrb[0].mxu0
        %526 = vdwg.mxu0
        %v527 = vsel %vm451, %v524, -inf
        %528 = vmax.xlane.f32.xlu0 %v527
        %v529 = vpop.xlane.xlu0 %528
        %v530 = vsub.f32 %v524, %v529
        %v531 = vmul.f32 %v530, 1.442695
        %v532 = vpow.pop %v531
        %v533 = vsel %vm451, %v532, 0.0
        %534 = vadd.xlane.f32.xlu0 %v533
        %v535 = vpop.xlane.xlu0 %534
        %v536 = vrcp.pop %v535
        %v537 = vmul.f32 %v532, %v536
        %538 = vst.msk [vmem:[%s360] sm:$0xff] %vm451, %v537
        %539 = vrot.lane.b32.xlu0 %v444, 64
        %v540 = vpop.permute.xlu0 %539
        %v543 = vsel %vm451, %v537, 0
        %545 = vmatprep.subr.mxu0 0.0
        %546 = vmatpush1.msra.mxu0 %v540
        %547 = vmatprep.subr.mxu0 0.0
        %548 = vmatpush1.msra.mxu0 0.0
        %549 = vmatprep.subr.mxu0 0.0
        %550 = vmatpush1.msra.mxu0 0.0
        %551 = vmatprep.subr.mxu0 0.0
        %552 = vmatpush1.msra.mxu0 0.0
        %553 = vmatprep.subr.mxu0 0.0
        %554 = vmatpush1.msra.mxu0 0.0
        %555 = vmatprep.subr.mxu0 0.0
        %556 = vmatpush1.msra.mxu0 0.0
        %557 = vmatprep.subr.mxu0 0.0
        %558 = vmatpush1.msra.mxu0 0.0
        %559 = vmatprep.subr.mxu0 0.0
        %560 = vmatpush1.msra.mxu0 0.0
        %561 = vmatprep.subr.mxu0 0.0
        %562 = vmatpush1.msra.mxu0 0.0
        %563 = vmatprep.subr.mxu0 0.0
        %564 = vmatpush1.msra.mxu0 0.0
        %565 = vmatprep.subr.mxu0 0.0
        %566 = vmatpush1.msra.mxu0 0.0
        %567 = vmatprep.subr.mxu0 0.0
        %568 = vmatpush1.msra.mxu0 0.0
        %569 = vmatprep.subr.mxu0 0.0
        %570 = vmatpush1.msra.mxu0 0.0
        %571 = vmatprep.subr.mxu0 0.0
        %572 = vmatpush1.msra.mxu0 0.0
        %573 = vmatprep.subr.mxu0 0.0
        %574 = vmatpush1.msra.mxu0 0.0
        %575 = vmatprep.subr.mxu0 0.0
        %576 = vmatpush1.msra.mxu0 0.0
        %577 = vmatprep.subr.mxu0 0.0
        %578 = vmatpush1.msra.mxu0 0.0
        %579 = vmatprep.subr.mxu0 0.0
        %580 = vmatpush1.msra.mxu0 0.0
        %581 = vmatprep.subr.mxu0 0.0
        %582 = vmatpush1.msra.mxu0 0.0
        %583 = vmatprep.subr.mxu0 0.0
        %584 = vmatpush1.msra.mxu0 0.0
        %585 = vmatprep.subr.mxu0 0.0
        %586 = vmatpush1.msra.mxu0 0.0
        %587 = vmatprep.subr.mxu0 0.0
        %588 = vmatpush1.msra.mxu0 0.0
        %589 = vmatprep.subr.mxu0 0.0
        %590 = vmatpush1.msra.mxu0 0.0
        %591 = vmatprep.subr.mxu0 0.0
        %592 = vmatpush1.msra.mxu0 0.0
        %593 = vmatprep.subr.mxu0 0.0
        %594 = vmatpush1.msra.mxu0 0.0
        %595 = vmatprep.subr.mxu0 0.0
        %596 = vmatpush1.msra.mxu0 0.0
        %597 = vmatprep.subr.mxu0 0.0
        %598 = vmatpush1.msra.mxu0 0.0
        %599 = vmatprep.subr.mxu0 0.0
        %600 = vmatpush1.msra.mxu0 0.0
        %601 = vmatprep.subr.mxu0 0.0
        %602 = vmatpush1.msra.mxu0 0.0
        %603 = vmatprep.subr.mxu0 0.0
        %604 = vmatpush1.msra.mxu0 0.0
        %605 = vmatprep.subr.mxu0 0.0
        %606 = vmatpush1.msra.mxu0 0.0
        %607 = vmatprep.subr.mxu0 0.0
        %608 = vmatpush1.msra.mxu0 0.0
        %609 = vmatprep.mubr.f32.mxu0 0.0
        %610 = vmatmul.mubr.f32.gmra.mrb[0].mxu0 %v543
        %v611 = vpop.f32.mrb[0].mxu0
        %v612 = vadd.f32 0.0, %v611
        %v613 = vpop.f32.mrb[0].mxu0
        %614 = vdwg.mxu0
        %615 = vst.msk [vmem:[#allocation2] sm:$0xff] %vm451, %v612
        %616 = vrot.lane.b32.xlu0 %v447, 120
        %v617 = vpop.permute.xlu0 %616
        %618 = vrot.lane.b32.xlu0 %v444, 88
        %v619 = vpop.permute.xlu0 %618
        %v620 = vsel %vm451, %v617, 0
        %v622 = vsel %vm451, %v619, 0
        %624 = vmatprep.subr.mxu0 0.0
        %625 = vmatpush1.xpose.msra.mxu0 %v622
        %626 = vmatprep.subr.mxu0 0.0
        %627 = vmatpush1.xpose.msra.mxu0 0.0
        %628 = vmatprep.subr.mxu0 0.0
        %629 = vmatpush1.xpose.msra.mxu0 0.0
        %630 = vmatprep.subr.mxu0 0.0
        %631 = vmatpush1.xpose.msra.mxu0 0.0
        %632 = vmatprep.subr.mxu0 0.0
        %633 = vmatpush1.xpose.msra.mxu0 0.0
        %634 = vmatprep.subr.mxu0 0.0
        %635 = vmatpush1.xpose.msra.mxu0 0.0
        %636 = vmatprep.subr.mxu0 0.0
        %637 = vmatpush1.xpose.msra.mxu0 0.0
        %638 = vmatprep.subr.mxu0 0.0
        %639 = vmatpush1.xpose.msra.mxu0 0.0
        %640 = vmatprep.subr.mxu0 0.0
        %641 = vmatpush1.xpose.msra.mxu0 0.0
        %642 = vmatprep.subr.mxu0 0.0
        %643 = vmatpush1.xpose.msra.mxu0 0.0
        %644 = vmatprep.subr.mxu0 0.0
        %645 = vmatpush1.xpose.msra.mxu0 0.0
        %646 = vmatprep.subr.mxu0 0.0
        %647 = vmatpush1.xpose.msra.mxu0 0.0
        %648 = vmatprep.subr.mxu0 0.0
        %649 = vmatpush1.xpose.msra.mxu0 0.0
        %650 = vmatprep.subr.mxu0 0.0
        %651 = vmatpush1.xpose.msra.mxu0 0.0
        %652 = vmatprep.subr.mxu0 0.0
        %653 = vmatpush1.xpose.msra.mxu0 0.0
        %654 = vmatprep.subr.mxu0 0.0
        %655 = vmatpush1.xpose.msra.mxu0 0.0
        %656 = vmatprep.subr.mxu0 0.0
        %657 = vmatpush1.xpose.msra.mxu0 0.0
        %658 = vmatprep.subr.mxu0 0.0
        %659 = vmatpush1.xpose.msra.mxu0 0.0
        %660 = vmatprep.subr.mxu0 0.0
        %661 = vmatpush1.xpose.msra.mxu0 0.0
        %662 = vmatprep.subr.mxu0 0.0
        %663 = vmatpush1.xpose.msra.mxu0 0.0
        %664 = vmatprep.subr.mxu0 0.0
        %665 = vmatpush1.xpose.msra.mxu0 0.0
        %666 = vmatprep.subr.mxu0 0.0
        %667 = vmatpush1.xpose.msra.mxu0 0.0
        %668 = vmatprep.subr.mxu0 0.0
        %669 = vmatpush1.xpose.msra.mxu0 0.0
        %670 = vmatprep.subr.mxu0 0.0
        %671 = vmatpush1.xpose.msra.mxu0 0.0
        %672 = vmatprep.subr.mxu0 0.0
        %673 = vmatpush1.xpose.msra.mxu0 0.0
        %674 = vmatprep.subr.mxu0 0.0
        %675 = vmatpush1.xpose.msra.mxu0 0.0
        %676 = vmatprep.subr.mxu0 0.0
        %677 = vmatpush1.xpose.msra.mxu0 0.0
        %678 = vmatprep.subr.mxu0 0.0
        %679 = vmatpush1.xpose.msra.mxu0 0.0
        %680 = vmatprep.subr.mxu0 0.0
        %681 = vmatpush1.xpose.msra.mxu0 0.0
        %682 = vmatprep.subr.mxu0 0.0
        %683 = vmatpush1.xpose.msra.mxu0 0.0
        %684 = vmatprep.subr.mxu0 0.0
        %685 = vmatpush1.xpose.msra.mxu0 0.0
        %686 = vmatprep.subr.mxu0 0.0
        %687 = vmatpush1.xpose.msra.mxu0 0.0
        %688 = vmatprep.mubr.f32.mxu0 0.0
        %689 = vmatmul.mubr.f32.gmra.mrb[0].mxu0 %v620
        %v690 = vpop.f32.mrb[0].mxu0
        %v691 = vadd.f32 0.0, %v690
        %v692 = vpop.f32.mrb[0].mxu0
        %693 = vdwg.mxu0
        %v694 = vsel %vm451, %v691, -inf
        %695 = vmax.xlane.f32.xlu0 %v694
        %v696 = vpop.xlane.xlu0 %695
        %v697 = vsub.f32 %v691, %v696
        %v698 = vmul.f32 %v697, 1.442695
        %v699 = vpow.pop %v698
        %v700 = vsel %vm451, %v699, 0.0
        %701 = vadd.xlane.f32.xlu0 %v700
        %v702 = vpop.xlane.xlu0 %701
        %v703 = vrcp.pop %v702
        %v704 = vmul.f32 %v699, %v703
        %s705 = scalar_lea.vmem %s360, 8 [#allocation10]
        %706 = vst.msk [vmem:[%s705] sm:$0xff] %vm451, %v704
        %707 = vrot.lane.b32.xlu0 %v444, 56
        %v708 = vpop.permute.xlu0 %707
        %v711 = vsel %vm451, %v704, 0
        %713 = vmatprep.subr.mxu0 0.0
        %714 = vmatpush1.msra.mxu0 %v708
        %715 = vmatprep.subr.mxu0 0.0
        %716 = vmatpush1.msra.mxu0 0.0
        %717 = vmatprep.subr.mxu0 0.0
        %718 = vmatpush1.msra.mxu0 0.0
        %719 = vmatprep.subr.mxu0 0.0
        %720 = vmatpush1.msra.mxu0 0.0
        %721 = vmatprep.subr.mxu0 0.0
        %722 = vmatpush1.msra.mxu0 0.0
        %723 = vmatprep.subr.mxu0 0.0
        %724 = vmatpush1.msra.mxu0 0.0
        %725 = vmatprep.subr.mxu0 0.0
        %726 = vmatpush1.msra.mxu0 0.0
        %727 = vmatprep.subr.mxu0 0.0
        %728 = vmatpush1.msra.mxu0 0.0
        %729 = vmatprep.subr.mxu0 0.0
        %730 = vmatpush1.msra.mxu0 0.0
        %731 = vmatprep.subr.mxu0 0.0
        %732 = vmatpush1.msra.mxu0 0.0
        %733 = vmatprep.subr.mxu0 0.0
        %734 = vmatpush1.msra.mxu0 0.0
        %735 = vmatprep.subr.mxu0 0.0
        %736 = vmatpush1.msra.mxu0 0.0
        %737 = vmatprep.subr.mxu0 0.0
        %738 = vmatpush1.msra.mxu0 0.0
        %739 = vmatprep.subr.mxu0 0.0
        %740 = vmatpush1.msra.mxu0 0.0
        %741 = vmatprep.subr.mxu0 0.0
        %742 = vmatpush1.msra.mxu0 0.0
        %743 = vmatprep.subr.mxu0 0.0
        %744 = vmatpush1.msra.mxu0 0.0
        %745 = vmatprep.subr.mxu0 0.0
        %746 = vmatpush1.msra.mxu0 0.0
        %747 = vmatprep.subr.mxu0 0.0
        %748 = vmatpush1.msra.mxu0 0.0
        %749 = vmatprep.subr.mxu0 0.0
        %750 = vmatpush1.msra.mxu0 0.0
        %751 = vmatprep.subr.mxu0 0.0
        %752 = vmatpush1.msra.mxu0 0.0
        %753 = vmatprep.subr.mxu0 0.0
        %754 = vmatpush1.msra.mxu0 0.0
        %755 = vmatprep.subr.mxu0 0.0
        %756 = vmatpush1.msra.mxu0 0.0
        %757 = vmatprep.subr.mxu0 0.0
        %758 = vmatpush1.msra.mxu0 0.0
        %759 = vmatprep.subr.mxu0 0.0
        %760 = vmatpush1.msra.mxu0 0.0
        %761 = vmatprep.subr.mxu0 0.0
        %762 = vmatpush1.msra.mxu0 0.0
        %763 = vmatprep.subr.mxu0 0.0
        %764 = vmatpush1.msra.mxu0 0.0
        %765 = vmatprep.subr.mxu0 0.0
        %766 = vmatpush1.msra.mxu0 0.0
        %767 = vmatprep.subr.mxu0 0.0
        %768 = vmatpush1.msra.mxu0 0.0
        %769 = vmatprep.subr.mxu0 0.0
        %770 = vmatpush1.msra.mxu0 0.0
        %771 = vmatprep.subr.mxu0 0.0
        %772 = vmatpush1.msra.mxu0 0.0
        %773 = vmatprep.subr.mxu0 0.0
        %774 = vmatpush1.msra.mxu0 0.0
        %775 = vmatprep.subr.mxu0 0.0
        %776 = vmatpush1.msra.mxu0 0.0
        %777 = vmatprep.mubr.f32.mxu0 0.0
        %778 = vmatmul.mubr.f32.gmra.mrb[0].mxu0 %v711
        %v779 = vpop.f32.mrb[0].mxu0
        %v780 = vadd.f32 0.0, %v779
        %v781 = vpop.f32.mrb[0].mxu0
        %782 = vdwg.mxu0
        %784 = vrot.lane.b32.xlu0 %v780, 8
        %v785 = vpop.permute.xlu0 %784
        %vm787 = vcmask 130112
        %788 = vst.msk [vmem:[#allocation2] sm:$0xff] %vm787, %v785
        %789 = vrot.lane.b32.xlu0 %v447, 112
        %v790 = vpop.permute.xlu0 %789
        %791 = vrot.lane.b32.xlu0 %v444, 80
        %v792 = vpop.permute.xlu0 %791
        %v793 = vsel %vm451, %v790, 0
        %v795 = vsel %vm451, %v792, 0
        %797 = vmatprep.subr.mxu0 0.0
        %798 = vmatpush1.xpose.msra.mxu0 %v795
        %799 = vmatprep.subr.mxu0 0.0
        %800 = vmatpush1.xpose.msra.mxu0 0.0
        %801 = vmatprep.subr.mxu0 0.0
        %802 = vmatpush1.xpose.msra.mxu0 0.0
        %803 = vmatprep.subr.mxu0 0.0
        %804 = vmatpush1.xpose.msra.mxu0 0.0
        %805 = vmatprep.subr.mxu0 0.0
        %806 = vmatpush1.xpose.msra.mxu0 0.0
        %807 = vmatprep.subr.mxu0 0.0
        %808 = vmatpush1.xpose.msra.mxu0 0.0
        %809 = vmatprep.subr.mxu0 0.0
        %810 = vmatpush1.xpose.msra.mxu0 0.0
        %811 = vmatprep.subr.mxu0 0.0
        %812 = vmatpush1.xpose.msra.mxu0 0.0
        %813 = vmatprep.subr.mxu0 0.0
        %814 = vmatpush1.xpose.msra.mxu0 0.0
        %815 = vmatprep.subr.mxu0 0.0
        %816 = vmatpush1.xpose.msra.mxu0 0.0
        %817 = vmatprep.subr.mxu0 0.0
        %818 = vmatpush1.xpose.msra.mxu0 0.0
        %819 = vmatprep.subr.mxu0 0.0
        %820 = vmatpush1.xpose.msra.mxu0 0.0
        %821 = vmatprep.subr.mxu0 0.0
        %822 = vmatpush1.xpose.msra.mxu0 0.0
        %823 = vmatprep.subr.mxu0 0.0
        %824 = vmatpush1.xpose.msra.mxu0 0.0
        %825 = vmatprep.subr.mxu0 0.0
        %826 = vmatpush1.xpose.msra.mxu0 0.0
        %827 = vmatprep.subr.mxu0 0.0
        %828 = vmatpush1.xpose.msra.mxu0 0.0
        %829 = vmatprep.subr.mxu0 0.0
        %830 = vmatpush1.xpose.msra.mxu0 0.0
        %831 = vmatprep.subr.mxu0 0.0
        %832 = vmatpush1.xpose.msra.mxu0 0.0
        %833 = vmatprep.subr.mxu0 0.0
        %834 = vmatpush1.xpose.msra.mxu0 0.0
        %835 = vmatprep.subr.mxu0 0.0
        %836 = vmatpush1.xpose.msra.mxu0 0.0
        %837 = vmatprep.subr.mxu0 0.0
        %838 = vmatpush1.xpose.msra.mxu0 0.0
        %839 = vmatprep.subr.mxu0 0.0
        %840 = vmatpush1.xpose.msra.mxu0 0.0
        %841 = vmatprep.subr.mxu0 0.0
        %842 = vmatpush1.xpose.msra.mxu0 0.0
        %843 = vmatprep.subr.mxu0 0.0
        %844 = vmatpush1.xpose.msra.mxu0 0.0
        %845 = vmatprep.subr.mxu0 0.0
        %846 = vmatpush1.xpose.msra.mxu0 0.0
        %847 = vmatprep.subr.mxu0 0.0
        %848 = vmatpush1.xpose.msra.mxu0 0.0
        %849 = vmatprep.subr.mxu0 0.0
        %850 = vmatpush1.xpose.msra.mxu0 0.0
        %851 = vmatprep.subr.mxu0 0.0
        %852 = vmatpush1.xpose.msra.mxu0 0.0
        %853 = vmatprep.subr.mxu0 0.0
        %854 = vmatpush1.xpose.msra.mxu0 0.0
        %855 = vmatprep.subr.mxu0 0.0
        %856 = vmatpush1.xpose.msra.mxu0 0.0
        %857 = vmatprep.subr.mxu0 0.0
        %858 = vmatpush1.xpose.msra.mxu0 0.0
        %859 = vmatprep.subr.mxu0 0.0
        %860 = vmatpush1.xpose.msra.mxu0 0.0
        %861 = vmatprep.mubr.f32.mxu0 0.0
        %862 = vmatmul.mubr.f32.gmra.mrb[0].mxu0 %v793
        %v863 = vpop.f32.mrb[0].mxu0
        %v864 = vadd.f32 0.0, %v863
        %v865 = vpop.f32.mrb[0].mxu0
        %866 = vdwg.mxu0
        %v867 = vsel %vm451, %v864, -inf
        %868 = vmax.xlane.f32.xlu0 %v867
        %v869 = vpop.xlane.xlu0 %868
        %v870 = vsub.f32 %v864, %v869
        %v871 = vmul.f32 %v870, 1.442695
        %v872 = vpow.pop %v871
        %v873 = vsel %vm451, %v872, 0.0
        %874 = vadd.xlane.f32.xlu0 %v873
        %v875 = vpop.xlane.xlu0 %874
        %v876 = vrcp.pop %v875
        %v877 = vmul.f32 %v872, %v876
        %s878 = scalar_lea.vmem %s360, 16 [#allocation10]
        %879 = vst.msk [vmem:[%s878] sm:$0xff] %vm451, %v877
        %880 = vrot.lane.b32.xlu0 %v444, 48
        %v881 = vpop.permute.xlu0 %880
        %v884 = vsel %vm451, %v877, 0
        %886 = vmatprep.subr.mxu0 0.0
        %887 = vmatpush1.msra.mxu0 %v881
        %888 = vmatprep.subr.mxu0 0.0
        %889 = vmatpush1.msra.mxu0 0.0
        %890 = vmatprep.subr.mxu0 0.0
        %891 = vmatpush1.msra.mxu0 0.0
        %892 = vmatprep.subr.mxu0 0.0
        %893 = vmatpush1.msra.mxu0 0.0
        %894 = vmatprep.subr.mxu0 0.0
        %895 = vmatpush1.msra.mxu0 0.0
        %896 = vmatprep.subr.mxu0 0.0
        %897 = vmatpush1.msra.mxu0 0.0
        %898 = vmatprep.subr.mxu0 0.0
        %899 = vmatpush1.msra.mxu0 0.0
        %900 = vmatprep.subr.mxu0 0.0
        %901 = vmatpush1.msra.mxu0 0.0
        %902 = vmatprep.subr.mxu0 0.0
        %903 = vmatpush1.msra.mxu0 0.0
        %904 = vmatprep.subr.mxu0 0.0
        %905 = vmatpush1.msra.mxu0 0.0
        %906 = vmatprep.subr.mxu0 0.0
        %907 = vmatpush1.msra.mxu0 0.0
        %908 = vmatprep.subr.mxu0 0.0
        %909 = vmatpush1.msra.mxu0 0.0
        %910 = vmatprep.subr.mxu0 0.0
        %911 = vmatpush1.msra.mxu0 0.0
        %912 = vmatprep.subr.mxu0 0.0
        %913 = vmatpush1.msra.mxu0 0.0
        %914 = vmatprep.subr.mxu0 0.0
        %915 = vmatpush1.msra.mxu0 0.0
        %916 = vmatprep.subr.mxu0 0.0
        %917 = vmatpush1.msra.mxu0 0.0
        %918 = vmatprep.subr.mxu0 0.0
        %919 = vmatpush1.msra.mxu0 0.0
        %920 = vmatprep.subr.mxu0 0.0
        %921 = vmatpush1.msra.mxu0 0.0
        %922 = vmatprep.subr.mxu0 0.0
        %923 = vmatpush1.msra.mxu0 0.0
        %924 = vmatprep.subr.mxu0 0.0
        %925 = vmatpush1.msra.mxu0 0.0
        %926 = vmatprep.subr.mxu0 0.0
        %927 = vmatpush1.msra.mxu0 0.0
        %928 = vmatprep.subr.mxu0 0.0
        %929 = vmatpush1.msra.mxu0 0.0
        %930 = vmatprep.subr.mxu0 0.0
        %931 = vmatpush1.msra.mxu0 0.0
        %932 = vmatprep.subr.mxu0 0.0
        %933 = vmatpush1.msra.mxu0 0.0
        %934 = vmatprep.subr.mxu0 0.0
        %935 = vmatpush1.msra.mxu0 0.0
        %936 = vmatprep.subr.mxu0 0.0
        %937 = vmatpush1.msra.mxu0 0.0
        %938 = vmatprep.subr.mxu0 0.0
        %939 = vmatpush1.msra.mxu0 0.0
        %940 = vmatprep.subr.mxu0 0.0
        %941 = vmatpush1.msra.mxu0 0.0
        %942 = vmatprep.subr.mxu0 0.0
        %943 = vmatpush1.msra.mxu0 0.0
        %944 = vmatprep.subr.mxu0 0.0
        %945 = vmatpush1.msra.mxu0 0.0
        %946 = vmatprep.subr.mxu0 0.0
        %947 = vmatpush1.msra.mxu0 0.0
        %948 = vmatprep.subr.mxu0 0.0
        %949 = vmatpush1.msra.mxu0 0.0
        %950 = vmatprep.mubr.f32.mxu0 0.0
        %951 = vmatmul.mubr.f32.gmra.mrb[0].mxu0 %v884
        %v952 = vpop.f32.mrb[0].mxu0
        %v953 = vadd.f32 0.0, %v952
        %v954 = vpop.f32.mrb[0].mxu0
        %955 = vdwg.mxu0
        %957 = vrot.lane.b32.xlu0 %v953, 16
        %v958 = vpop.permute.xlu0 %957
        %vm960 = vcmask 195712
        %961 = vst.msk [vmem:[#allocation2] sm:$0xff] %vm960, %v958
        %962 = vrot.lane.b32.xlu0 %v447, 104
        %v963 = vpop.permute.xlu0 %962
        %964 = vrot.lane.b32.xlu0 %v444, 72
        %v965 = vpop.permute.xlu0 %964
        %v966 = vsel %vm451, %v963, 0
        %v968 = vsel %vm451, %v965, 0
        %970 = vmatprep.subr.mxu0 0.0
        %971 = vmatpush1.xpose.msra.mxu0 %v968
        %972 = vmatprep.subr.mxu0 0.0
        %973 = vmatpush1.xpose.msra.mxu0 0.0
        %974 = vmatprep.subr.mxu0 0.0
        %975 = vmatpush1.xpose.msra.mxu0 0.0
        %976 = vmatprep.subr.mxu0 0.0
        %977 = vmatpush1.xpose.msra.mxu0 0.0
        %978 = vmatprep.subr.mxu0 0.0
        %979 = vmatpush1.xpose.msra.mxu0 0.0
        %980 = vmatprep.subr.mxu0 0.0
        %981 = vmatpush1.xpose.msra.mxu0 0.0
        %982 = vmatprep.subr.mxu0 0.0
        %983 = vmatpush1.xpose.msra.mxu0 0.0
        %984 = vmatprep.subr.mxu0 0.0
        %985 = vmatpush1.xpose.msra.mxu0 0.0
        %986 = vmatprep.subr.mxu0 0.0
        %987 = vmatpush1.xpose.msra.mxu0 0.0
        %988 = vmatprep.subr.mxu0 0.0
        %989 = vmatpush1.xpose.msra.mxu0 0.0
        %990 = vmatprep.subr.mxu0 0.0
        %991 = vmatpush1.xpose.msra.mxu0 0.0
        %992 = vmatprep.subr.mxu0 0.0
        %993 = vmatpush1.xpose.msra.mxu0 0.0
        %994 = vmatprep.subr.mxu0 0.0
        %995 = vmatpush1.xpose.msra.mxu0 0.0
        %996 = vmatprep.subr.mxu0 0.0
        %997 = vmatpush1.xpose.msra.mxu0 0.0
        %998 = vmatprep.subr.mxu0 0.0
        %999 = vmatpush1.xpose.msra.mxu0 0.0
        %1000 = vmatprep.subr.mxu0 0.0
        %1001 = vmatpush1.xpose.msra.mxu0 0.0
        %1002 = vmatprep.subr.mxu0 0.0
        %1003 = vmatpush1.xpose.msra.mxu0 0.0
        %1004 = vmatprep.subr.mxu0 0.0
        %1005 = vmatpush1.xpose.msra.mxu0 0.0
        %1006 = vmatprep.subr.mxu0 0.0
        %1007 = vmatpush1.xpose.msra.mxu0 0.0
        %1008 = vmatprep.subr.mxu0 0.0
        %1009 = vmatpush1.xpose.msra.mxu0 0.0
        %1010 = vmatprep.subr.mxu0 0.0
        %1011 = vmatpush1.xpose.msra.mxu0 0.0
        %1012 = vmatprep.subr.mxu0 0.0
        %1013 = vmatpush1.xpose.msra.mxu0 0.0
        %1014 = vmatprep.subr.mxu0 0.0
        %1015 = vmatpush1.xpose.msra.mxu0 0.0
        %1016 = vmatprep.subr.mxu0 0.0
        %1017 = vmatpush1.xpose.msra.mxu0 0.0
        %1018 = vmatprep.subr.mxu0 0.0
        %1019 = vmatpush1.xpose.msra.mxu0 0.0
        %1020 = vmatprep.subr.mxu0 0.0
        %1021 = vmatpush1.xpose.msra.mxu0 0.0
        %1022 = vmatprep.subr.mxu0 0.0
        %1023 = vmatpush1.xpose.msra.mxu0 0.0
        %1024 = vmatprep.subr.mxu0 0.0
        %1025 = vmatpush1.xpose.msra.mxu0 0.0
        %1026 = vmatprep.subr.mxu0 0.0
        %1027 = vmatpush1.xpose.msra.mxu0 0.0
        %1028 = vmatprep.subr.mxu0 0.0
        %1029 = vmatpush1.xpose.msra.mxu0 0.0
        %1030 = vmatprep.subr.mxu0 0.0
        %1031 = vmatpush1.xpose.msra.mxu0 0.0
        %1032 = vmatprep.subr.mxu0 0.0
        %1033 = vmatpush1.xpose.msra.mxu0 0.0
        %1034 = vmatprep.mubr.f32.mxu0 0.0
        %1035 = vmatmul.mubr.f32.gmra.mrb[0].mxu0 %v966
        %v1036 = vpop.f32.mrb[0].mxu0
        %v1037 = vadd.f32 0.0, %v1036
        %v1038 = vpop.f32.mrb[0].mxu0
        %1039 = vdwg.mxu0
        %v1040 = vsel %vm451, %v1037, -inf
        %1041 = vmax.xlane.f32.xlu0 %v1040
        %v1042 = vpop.xlane.xlu0 %1041
        %v1043 = vsub.f32 %v1037, %v1042
        %v1044 = vmul.f32 %v1043, 1.442695
        %v1045 = vpow.pop %v1044
        %v1046 = vsel %vm451, %v1045, 0.0
        %1047 = vadd.xlane.f32.xlu0 %v1046
        %v1048 = vpop.xlane.xlu0 %1047
        %v1049 = vrcp.pop %v1048
        %v1050 = vmul.f32 %v1045, %v1049
        %s1051 = scalar_lea.vmem %s360, 24 [#allocation10]
        %1052 = vst.msk [vmem:[%s1051] sm:$0xff] %vm451, %v1050
        %1053 = vrot.lane.b32.xlu0 %v444, 40
        %v1054 = vpop.permute.xlu0 %1053
        %v1057 = vsel %vm451, %v1050, 0
        %1059 = vmatprep.subr.mxu0 0.0
        %1060 = vmatpush1.msra.mxu0 %v1054
        %1061 = vmatprep.subr.mxu0 0.0
        %1062 = vmatpush1.msra.mxu0 0.0
        %1063 = vmatprep.subr.mxu0 0.0
        %1064 = vmatpush1.msra.mxu0 0.0
        %1065 = vmatprep.subr.mxu0 0.0
        %1066 = vmatpush1.msra.mxu0 0.0
        %1067 = vmatprep.subr.mxu0 0.0
        %1068 = vmatpush1.msra.mxu0 0.0
        %1069 = vmatprep.subr.mxu0 0.0
        %1070 = vmatpush1.msra.mxu0 0.0
        %1071 = vmatprep.subr.mxu0 0.0
        %1072 = vmatpush1.msra.mxu0 0.0
        %1073 = vmatprep.subr.mxu0 0.0
        %1074 = vmatpush1.msra.mxu0 0.0
        %1075 = vmatprep.subr.mxu0 0.0
        %1076 = vmatpush1.msra.mxu0 0.0
        %1077 = vmatprep.subr.mxu0 0.0
        %1078 = vmatpush1.msra.mxu0 0.0
        %1079 = vmatprep.subr.mxu0 0.0
        %1080 = vmatpush1.msra.mxu0 0.0
        %1081 = vmatprep.subr.mxu0 0.0
        %1082 = vmatpush1.msra.mxu0 0.0
        %1083 = vmatprep.subr.mxu0 0.0
        %1084 = vmatpush1.msra.mxu0 0.0
        %1085 = vmatprep.subr.mxu0 0.0
        %1086 = vmatpush1.msra.mxu0 0.0
        %1087 = vmatprep.subr.mxu0 0.0
        %1088 = vmatpush1.msra.mxu0 0.0
        %1089 = vmatprep.subr.mxu0 0.0
        %1090 = vmatpush1.msra.mxu0 0.0
        %1091 = vmatprep.subr.mxu0 0.0
        %1092 = vmatpush1.msra.mxu0 0.0
        %1093 = vmatprep.subr.mxu0 0.0
        %1094 = vmatpush1.msra.mxu0 0.0
        %1095 = vmatprep.subr.mxu0 0.0
        %1096 = vmatpush1.msra.mxu0 0.0
        %1097 = vmatprep.subr.mxu0 0.0
        %1098 = vmatpush1.msra.mxu0 0.0
        %1099 = vmatprep.subr.mxu0 0.0
        %1100 = vmatpush1.msra.mxu0 0.0
        %1101 = vmatprep.subr.mxu0 0.0
        %1102 = vmatpush1.msra.mxu0 0.0
        %1103 = vmatprep.subr.mxu0 0.0
        %1104 = vmatpush1.msra.mxu0 0.0
        %1105 = vmatprep.subr.mxu0 0.0
        %1106 = vmatpush1.msra.mxu0 0.0
        %1107 = vmatprep.subr.mxu0 0.0
        %1108 = vmatpush1.msra.mxu0 0.0
        %1109 = vmatprep.subr.mxu0 0.0
        %1110 = vmatpush1.msra.mxu0 0.0
        %1111 = vmatprep.subr.mxu0 0.0
        %1112 = vmatpush1.msra.mxu0 0.0
        %1113 = vmatprep.subr.mxu0 0.0
        %1114 = vmatpush1.msra.mxu0 0.0
        %1115 = vmatprep.subr.mxu0 0.0
        %1116 = vmatpush1.msra.mxu0 0.0
        %1117 = vmatprep.subr.mxu0 0.0
        %1118 = vmatpush1.msra.mxu0 0.0
        %1119 = vmatprep.subr.mxu0 0.0
        %1120 = vmatpush1.msra.mxu0 0.0
        %1121 = vmatprep.subr.mxu0 0.0
        %1122 = vmatpush1.msra.mxu0 0.0
        %1123 = vmatprep.mubr.f32.mxu0 0.0
        %1124 = vmatmul.mubr.f32.gmra.mrb[0].mxu0 %v1057
        %v1125 = vpop.f32.mrb[0].mxu0
        %v1126 = vadd.f32 0.0, %v1125
        %v1127 = vpop.f32.mrb[0].mxu0
        %1128 = vdwg.mxu0
        %1130 = vrot.lane.b32.xlu0 %v1126, 24
        %v1131 = vpop.permute.xlu0 %1130
        %vm1133 = vcmask 261312
        %1134 = vst.msk [vmem:[#allocation2] sm:$0xff] %vm1133, %v1131
        %v1135 = vld [vmem:[#allocation2] sm:$0xff]
        %v1136 = vld [vmem:[#allocation8] sm:$0xff]
        %v1137 = vld [vmem:[#allocation8 + $0x8] sm:$0xff]
        %v1138 = vld [vmem:[#allocation8 + $0x10] sm:$0xff]
        %v1139 = vld [vmem:[#allocation8 + $0x18] sm:$0xff]
        %v1140 = vld [vmem:[%s4] sm:$0x1]
        %v1142 = vlaneseq
        %v1143 = vshrl.u32 %v1142, 7
        %v1144 = vsub.s32 0, %v1143
        %v1145 = vrot.slane %v1140, %v1144
        %v1148 = vsel %vm373, %v1135, 0
        %1150 = vmatprep.subr.mxu0 0.0
        %1151 = vmatpush1.msra.mxu0 %v1136
        %1152 = vmatprep.subr.mxu0 0.0
        %1153 = vmatpush1.msra.mxu0 %v1137
        %1154 = vmatprep.subr.mxu0 0.0
        %1155 = vmatpush1.msra.mxu0 %v1138
        %1156 = vmatprep.subr.mxu0 0.0
        %1157 = vmatpush1.msra.mxu0 %v1139
        %1158 = vmatprep.subr.mxu0 0.0
        %1159 = vmatpush1.msra.mxu0 0.0
        %1160 = vmatprep.subr.mxu0 0.0
        %1161 = vmatpush1.msra.mxu0 0.0
        %1162 = vmatprep.subr.mxu0 0.0
        %1163 = vmatpush1.msra.mxu0 0.0
        %1164 = vmatprep.subr.mxu0 0.0
        %1165 = vmatpush1.msra.mxu0 0.0
        %1166 = vmatprep.subr.mxu0 0.0
        %1167 = vmatpush1.msra.mxu0 0.0
        %1168 = vmatprep.subr.mxu0 0.0
        %1169 = vmatpush1.msra.mxu0 0.0
        %1170 = vmatprep.subr.mxu0 0.0
        %1171 = vmatpush1.msra.mxu0 0.0
        %1172 = vmatprep.subr.mxu0 0.0
        %1173 = vmatpush1.msra.mxu0 0.0
        %1174 = vmatprep.subr.mxu0 0.0
        %1175 = vmatpush1.msra.mxu0 0.0
        %1176 = vmatprep.subr.mxu0 0.0
        %1177 = vmatpush1.msra.mxu0 0.0
        %1178 = vmatprep.subr.mxu0 0.0
        %1179 = vmatpush1.msra.mxu0 0.0
        %1180 = vmatprep.subr.mxu0 0.0
        %1181 = vmatpush1.msra.mxu0 0.0
        %1182 = vmatprep.subr.mxu0 0.0
        %1183 = vmatpush1.msra.mxu0 0.0
        %1184 = vmatprep.subr.mxu0 0.0
        %1185 = vmatpush1.msra.mxu0 0.0
        %1186 = vmatprep.subr.mxu0 0.0
        %1187 = vmatpush1.msra.mxu0 0.0
        %1188 = vmatprep.subr.mxu0 0.0
        %1189 = vmatpush1.msra.mxu0 0.0
        %1190 = vmatprep.subr.mxu0 0.0
        %1191 = vmatpush1.msra.mxu0 0.0
        %1192 = vmatprep.subr.mxu0 0.0
        %1193 = vmatpush1.msra.mxu0 0.0
        %1194 = vmatprep.subr.mxu0 0.0
        %1195 = vmatpush1.msra.mxu0 0.0
        %1196 = vmatprep.subr.mxu0 0.0
        %1197 = vmatpush1.msra.mxu0 0.0
        %1198 = vmatprep.subr.mxu0 0.0
        %1199 = vmatpush1.msra.mxu0 0.0
        %1200 = vmatprep.subr.mxu0 0.0
        %1201 = vmatpush1.msra.mxu0 0.0
        %1202 = vmatprep.subr.mxu0 0.0
        %1203 = vmatpush1.msra.mxu0 0.0
        %1204 = vmatprep.subr.mxu0 0.0
        %1205 = vmatpush1.msra.mxu0 0.0
        %1206 = vmatprep.subr.mxu0 0.0
        %1207 = vmatpush1.msra.mxu0 0.0
        %1208 = vmatprep.subr.mxu0 0.0
        %1209 = vmatpush1.msra.mxu0 0.0
        %1210 = vmatprep.subr.mxu0 0.0
        %1211 = vmatpush1.msra.mxu0 0.0
        %1212 = vmatprep.subr.mxu0 0.0
        %1213 = vmatpush1.msra.mxu0 0.0
        %1214 = vmatprep.mubr.f32.mxu0 0.0
        %1215 = vmatmul.mubr.f32.gmra.mrb[0].mxu0 %v1148
        %v1216 = vpop.f32.mrb[0].mxu0
        %v1217 = vadd.f32 %v1145, %v1216
        %v1218 = vpop.f32.mrb[0].mxu0
        %1219 = vdwg.mxu0
        %v1220 = vadd.f32 %v1217, %v361
        %v1221 = vld [vmem:[%s5] sm:$0x1]
        %v1222 = vld [vmem:[%s6] sm:$0x1]
        %v1223 = vsel %vm373, %v1220, 0.0
        %1224 = vadd.xlane.f32.xlu0 %v1223
        %v1225 = vpop.xlane.xlu0 %1224
        %v1226 = vrcp.pop 32.0
        %v1227 = vmul.f32 %v1225, %v1226
        %v1228 = vsub.f32 %v1220, %v1227
        %v1229 = vmul.f32 %v1228, %v1228
        %v1230 = vsel %vm373, %v1229, 0.0
        %1231 = vadd.xlane.f32.xlu0 %v1230
        %v1232 = vpop.xlane.xlu0 %1231
        %v1233 = vmul.f32 %v1232, %v1226
        %v1234 = vadd.f32 %v1233, 1e-05
        %v1235 = vrsqrt.pop %v1234
        %v1236 = vmul.f32 %v1228, %v1235
        %v1238 = vlaneseq
        %v1239 = vshrl.u32 %v1238, 7
        %v1240 = vsub.s32 0, %v1239
        %v1241 = vrot.slane %v1221, %v1240
        %v1243 = vmul.f32 %v1236, %v1241
        %v1245 = vlaneseq
        %v1246 = vshrl.u32 %v1245, 7
        %v1247 = vsub.s32 0, %v1246
        %v1248 = vrot.slane %v1222, %v1247
        %v1250 = vadd.f32 %v1243, %v1248
        %1251 = vst.msk [vmem:[%s353] sm:$0xff] %vm373, %v1250
        %s1252 = sand.u32 %s190, 1
        %s1253 = scalar_lea.sflag [#allocation5], %s1252
        %s1254 = sand.u32 %s190, 1
        %s1255 = smul.addr %s1254, 8
        %s1256 = scalar_lea.vmem [#allocation9], %s1255
        %s1257 = sand.u32 %s216, 1
        %s1258 = scalar_lea.sflag [#allocation11], %s1257
        %s1259 = sand.u32 %s216, 1
        %s1260 = smul.addr %s1259, 32
        %s1261 = scalar_lea.vmem [#allocation10], %s1260
        // Predicated region
        $region61: #{tpu_custom_call.1} parent=47 // pred_check
          %p1262 = pneg %p200
        $region62: #{tpu_custom_call.1} parent=47 // pred_check_branch
          %1264 = sbr.rel (%p1262) target = $region64
        $region63: #{tpu_custom_call.1} parent=47 // pred_region
          %s1266 = ssub.s32 128, 128
          %1267 = vsyncadd %s1253, %s1266
          %s1268 = smul.addr %s30, 128
          %s1269 = scalar_lea.hbm %s7, %s1268
          %s1271 = sshll.u32 %s1256, 4
          %s1272 = int_to_ptr.vmem [resolvable:$true] %s1271
          %1274 = dma.vmem_to_hbm [thread:$0]  %s1272, 128, %s1269, %s1253
        $region64: #{tpu_custom_call.1} parent=47 // pred_fallthru
          _
        // Predicated region
        $region65: #{tpu_custom_call.1} parent=47 // pred_check
          %p1275 = pneg %p226
        $region66: #{tpu_custom_call.1} parent=47 // pred_check_branch
          %1277 = sbr.rel (%p1275) target = $region68
        $region67: #{tpu_custom_call.1} parent=47 // pred_region
          %s1279 = ssub.s32 512, 512
          %1280 = vsyncadd %s1258, %s1279
          %s1281 = smul.addr %s30, 4
          %s1282 = smul.addr %s1281, 128
          %s1283 = scalar_lea.hbm %s8, %s1282
          %s1284 = sshll.u32 %s1261, 4
          %s1285 = int_to_ptr.vmem [resolvable:$true] %s1284
          %1290 = dma.vmem_to_hbm [thread:$0]  %s1285, 512, %s1283, %s1258, 128, 128, 8
        $region68: #{tpu_custom_call.1} parent=47 // pred_fallthru
          _
      $region48: #{tpu_custom_call.1} parent=5 // pred_fallthru
        _
      %p1291 = scmp.le.s32.totalorder 2, %s25
      // Predicated region
      $region69: #{tpu_custom_call.1} parent=5 // pred_check
        %p1292 = pneg %p1291
      $region70: #{tpu_custom_call.1} parent=5 // pred_check_branch
        %1294 = sbr.rel (%p1292) target = $region72
      $region71: #{tpu_custom_call.1} parent=5 // pred_region
        %s1295 = ssub.s32 %s25, 2
        // Predicated region
        $region73: #{tpu_custom_call.1} parent=71 // pred_check
          %p1296 = pneg %p206
        $region74: #{tpu_custom_call.1} parent=71 // pred_check_branch
          %1298 = sbr.rel (%p1296) target = $region76
        $region75: #{tpu_custom_call.1} parent=71 // pred_region
          %s1299 = sand.u32 %s191, 1
          %s1300 = scalar_lea.sflag [#allocation5], %s1299
          %s1301 = sand.u32 %s191, 1
          %s1302 = smul.addr %s1301, 8
          %s1303 = scalar_lea.vmem [#allocation9], %s1302
          %1304 = dma.done %s1300, 128
        $region76: #{tpu_custom_call.1} parent=71 // pred_fallthru
          _
        // Predicated region
        $region77: #{tpu_custom_call.1} parent=71 // pred_check
          %p1305 = pneg %p232
        $region78: #{tpu_custom_call.1} parent=71 // pred_check_branch
          %1307 = sbr.rel (%p1305) target = $region80
        $region79: #{tpu_custom_call.1} parent=71 // pred_region
          %s1308 = sand.u32 %s217, 1
          %s1309 = scalar_lea.sflag [#allocation11], %s1308
          %s1310 = sand.u32 %s217, 1
          %s1311 = smul.addr %s1310, 32
          %s1312 = scalar_lea.vmem [#allocation10], %s1311
          %1313 = dma.done %s1309, 512
        $region80: #{tpu_custom_call.1} parent=71 // pred_fallthru
          _
      $region72: #{tpu_custom_call.1} parent=5 // pred_fallthru
        _
    $region6: #{tpu_custom_call.1} parent=1 // loop_footer
      %s29 = sadd.s32 1, %s25
    $region7: #{tpu_custom_call.1} parent=1 // loop_footer_branch
      %24 = sbr.rel target = $region3
    $region8: #{tpu_custom_call.1} parent=1 // loop_exit
      _
    %1314 = vsyncpa [#allocation4], 1
    %s1315 = scalar_lea.sflag [#allocation4], 1
    %1316 = vsyncpa %s1315, 1
    %1317 = vsyncpa [#allocation7], 1
    %1318 = vsyncpa [#allocation5], 1
    %s1319 = scalar_lea.sflag [#allocation5], 1
    %1320 = vsyncpa %s1319, 1
    %1321 = vsyncpa [#allocation11], 1
    %s1322 = scalar_lea.sflag [#allocation11], 1
    %1323 = vsyncpa %s1322, 1

</llo_original>
